<compile_context>
chip_gen: v6e
topology: v6e:2x2x1
jax: 0.10.0
libtpu: 0.0.40
codegen_flags: <defaults>
</compile_context>

<pallas_src>
import functools
import itertools

import numpy as np
import jax
import jax.numpy as jnp
from jax import lax
from jax.experimental import pallas as pl
from jax.experimental.pallas import tpu as pltpu

_INV_SQRT_2PI = float(1.0 / np.sqrt(2.0 * np.pi))


# --------------------------------------------------------------------------- in-kernel helpers

def _col_mask_and_n(xv_col_ref, thres):
    mask = (xv_col_ref[...] > thres).astype(jnp.float32)         # (P,1)
    n = jnp.sum(mask, keepdims=True)                             # (1,1)
    n_safe = jnp.maximum(n, 2.0)                                 # keeps all divides finite
    return mask, n, n_safe


def _row_mask(xv_row_ref, thres):
    return (xv_row_ref[...] > thres).astype(jnp.float32)


def _size_loss(mask_col, mask_row3, n_safe, sz_ref, sz0_ref, sz_row3_ref, sz_col3_ref,
               same_off3_ref):
    d = sz_ref[...] - sz0_ref[...]                               # (P,3)
    loss_v = jnp.sum(d * d * mask_col, keepdims=True) / n_safe
    # channel-packed pairwise slab (P, 3P): [i, c*P+j] = sz[j,c] - sz[i,c]
    ss = same_off3_ref[...] * mask_col * mask_row3               # same-size & valid, no diag
    dr = (sz_row3_ref[...] - sz_col3_ref[...]) * ss
    # ss is tiled 3x along lanes; /3 recovers the single-channel sum of the reference.
    loss_e = jnp.sum(dr * dr, keepdims=True) / (jnp.sum(ss, keepdims=True) * (1.0 / 3.0) + 1e-6)
    return loss_v + 10.0 * loss_e


def _rotation_loss(mask_col, mask_row, n_safe, ro_ref, roT_ref, ro0_ref, ip_init_ref, mr_ref):
    ro = ro_ref[...]                                             # (P,2)
    roT = roT_ref[...]                                           # (2,P)
    inv_c = lax.rsqrt(ro[:, 0:1] * ro[:, 0:1] + ro[:, 1:2] * ro[:, 1:2])        # (P,1)
    inv_r = lax.rsqrt(roT[0:1, :] * roT[0:1, :] + roT[1:2, :] * roT[1:2, :])    # (1,P)
    # |<ro_i, ro_j>| as two rank-1 outer products (no in-kernel transpose).
    ip = jnp.abs((ro[:, 0:1] * inv_c) * (roT[0:1, :] * inv_r)
                 + (ro[:, 1:2] * inv_c) * (roT[1:2, :] * inv_r))                # (P,P)
    mr = mr_ref[...] * mask_col * mask_row
    loss_e = (jnp.sum(jnp.abs(ip - ip_init_ref[...]) * mr, keepdims=True)
              / (jnp.sum(mr, keepdims=True) + 1e-6))
    dr = ro * inv_c - ro0_ref[...]
    loss_v = jnp.sum(dr * dr * mask_col, keepdims=True) / n_safe
    return loss_v + 100.0 * loss_e


def _translation_loss(mask_col, mask_row2, n_safe, txy_ref, txy0_ref,
                      coef_a_ref, mu_a_ref, isig_a_ref, w_abs_ref, isig_gv_ref, alpha_gv_ref,
                      txy_row2_ref, txy_col2_ref, coef_r_ref, mu_r_ref, isig_r_ref,
                      rel0_2_ref, w2sig4_ref, tri2_ref, num_mix):
    # ---- absolute terms ---------------------------------------------------------------
    txy = txy_ref[...]                                           # (P,2)
    pdf_abs = jnp.zeros_like(txy)
    for k in range(num_mix):                                     # normalization folded on host
        z = (txy - mu_a_ref[k]) * isig_a_ref[k]
        pdf_abs = pdf_abs + coef_a_ref[k] * jnp.exp(-0.5 * z * z)
    loss_v_prior = jnp.sum(-jnp.log(pdf_abs + 1e-6) * mask_col, keepdims=True)

    d = txy - txy0_ref[...]
    d2 = d * d * isig_gv_ref[...]
    d2sq = d2 * d2
    gm = d2sq / (d2sq + alpha_gv_ref[...])                       # Geman-McClure
    loss_v_recon = jnp.sum(gm * w_abs_ref[...] * mask_col, keepdims=True)

    # ---- relative terms, x/y channels packed on lanes: (P, 2P) ------------------------
    rel = txy_row2_ref[...] - txy_col2_ref[...]                  # [i, c*P+j] = txy[j,c]-txy[i,c]
    pdf_rel = jnp.zeros_like(rel)
    for k in range(num_mix):
        z = (rel - mu_r_ref[k]) * isig_r_ref[k]
        pdf_rel = pdf_rel + coef_r_ref[k] * jnp.exp(-0.5 * z * z)
    pair_mask = mask_col * mask_row2 * tri2_ref[...]             # valid & strict-upper pairs
    loss_e_prior = jnp.sum(-jnp.log(pdf_rel + 1e-6) * pair_mask, keepdims=True)
    dge = rel - rel0_2_ref[...]
    # w2sig4 = 4 * w_rel0^2 / sigma_ce  (host constant)
    loss_e_recon = jnp.sum(dge * dge * w2sig4_ref[...] * pair_mask, keepdims=True)

    denom_e = n_safe * n_safe - n_safe
    return (loss_v_recon / n_safe * 2.0
            + loss_v_prior / n_safe * 0.01
            + loss_e_recon / denom_e * 50.0
            + loss_e_prior / denom_e * 0.05)


# --------------------------------------------------------------------------- kernels

def _sync_size_kernel(xv_col_ref, xv_row3_ref, sz_ref, sz0_ref, sz_row3_ref, sz_col3_ref,
                      same_off3_ref, out_ref, *, thres):
    mask, n, n_safe = _col_mask_and_n(xv_col_ref, thres)
    loss = _size_loss(mask, _row_mask(xv_row3_ref, thres), n_safe,
                      sz_ref, sz0_ref, sz_row3_ref, sz_col3_ref, same_off3_ref)
    out_ref[...] = jnp.where(n > 1.0, loss, jnp.zeros_like(loss))


def _sync_rotation_kernel(xv_col_ref, xv_row_ref, ro_ref, roT_ref, ro0_ref, ip_init_ref, mr_ref,
                          out_ref, *, thres):
    mask, n, n_safe = _col_mask_and_n(xv_col_ref, thres)
    loss = _rotation_loss(mask, _row_mask(xv_row_ref, thres), n_safe,
                          ro_ref, roT_ref, ro0_ref, ip_init_ref, mr_ref)
    out_ref[...] = jnp.where(n > 1.0, loss, jnp.zeros_like(loss))


def _sync_translation_kernel(xv_col_ref, xv_row2_ref, txy_ref, txy0_ref,
                             coef_a_ref, mu_a_ref, isig_a_ref, w_abs_ref,
                             isig_gv_ref, alpha_gv_ref,
                             txy_row2_ref, txy_col2_ref,
                             coef_r_ref, mu_r_ref, isig_r_ref,
                             rel0_2_ref, w2sig4_ref, tri2_ref,
                             out_ref, *, thres, num_mix):
    mask, n, n_safe = _col_mask_and_n(xv_col_ref, thres)
    loss = _translation_loss(mask, _row_mask(xv_row2_ref, thres), n_safe,
                             txy_ref, txy0_ref, coef_a_ref, mu_a_ref, isig_a_ref, w_abs_ref,
                             isig_gv_ref, alpha_gv_ref, txy_row2_ref, txy_col2_ref,
                             coef_r_ref, mu_r_ref, isig_r_ref, rel0_2_ref, w2sig4_ref, tri2_ref,
                             num_mix)
    out_ref[...] = jnp.where(n > 1.0, loss, jnp.zeros_like(loss))


def _fused_kernel(xv_col_ref,
                  xv_row3_ref, sz_ref, sz0_ref, sz_row3_ref, sz_col3_ref, same_off3_ref,
                  xv_row_ref, ro_ref, roT_ref, ro0_ref, ip_init_ref, mr_ref,
                  xv_row2_ref, txy_ref, txy0_ref, coef_a_ref, mu_a_ref, isig_a_ref, w_abs_ref,
                  isig_gv_ref, alpha_gv_ref, txy_row2_ref, txy_col2_ref,
                  coef_r_ref, mu_r_ref, isig_r_ref, rel0_2_ref, w2sig4_ref, tri2_ref,
                  out_sz_ref, out_ro_ref, out_tr_ref, *, thres, num_mix):
    mask, n, n_safe = _col_mask_and_n(xv_col_ref, thres)
    gate = lambda l: jnp.where(n > 1.0, l, jnp.zeros_like(l))
    out_sz_ref[...] = gate(_size_loss(mask, _row_mask(xv_row3_ref, thres), n_safe,
                                      sz_ref, sz0_ref, sz_row3_ref, sz_col3_ref, same_off3_ref))
    out_ro_ref[...] = gate(_rotation_loss(mask, _row_mask(xv_row_ref, thres), n_safe,
                                          ro_ref, roT_ref, ro0_ref, ip_init_ref, mr_ref))
    out_tr_ref[...] = gate(_translation_loss(mask, _row_mask(xv_row2_ref, thres), n_safe,
                                             txy_ref, txy0_ref, coef_a_ref, mu_a_ref, isig_a_ref,
                                             w_abs_ref, isig_gv_ref, alpha_gv_ref,
                                             txy_row2_ref, txy_col2_ref,
                                             coef_r_ref, mu_r_ref, isig_r_ref,
                                             rel0_2_ref, w2sig4_ref, tri2_ref, num_mix))


def _run_pallas(kernel, inputs, num_outputs=1):
    out_shape = tuple(jax.ShapeDtypeStruct((1, 1), jnp.float32) for _ in range(num_outputs))
    out_specs = tuple(pl.BlockSpec(memory_space=pltpu.MemorySpace.VMEM)
                      for _ in range(num_outputs))
    if num_outputs == 1:
        out_shape, out_specs = out_shape[0], out_specs[0]
    outs = pl.pallas_call(
        kernel,
        out_shape=out_shape,
        in_specs=[pl.BlockSpec(memory_space=pltpu.MemorySpace.VMEM)] * len(inputs),
        out_specs=out_specs,
    )(*inputs)
    if num_outputs == 1:
        return outs[0, 0]
    return tuple(o[0, 0] for o in outs)


# --------------------------------------------------------------------------- module wrapper

class SolverGvPallas:
    """JAX/Pallas re-implementation of Solver_Gv's forward pass."""

    def __init__(self, hyper_params_dict, ro_abs_all0, tn_abs_all0, sz_abs_all0,
                 rotation_class0, tn_rel_all0, same_size0, rel_size0,
                 Pcv_abs, Pcv_rel, Povl, Prot_abs, Prot_rel,
                 num_class, num_each_class, valid_thres=None, mask_rotation_thres=0.15):
        f32 = jnp.float32
        to = lambda a: jnp.asarray(a, f32)
        C, E = num_class, num_each_class
        P = C * E
        self.num_class, self.num_each_class, self.max_parts = C, E, P
        # Only scalar valid_thres supported (the per-object array variant is not exercised here).
        self.valid_thres = 0.5 if valid_thres is None else float(valid_thres)

        cls = np.arange(P, dtype=np.int32) // E

        # ---- optimizable parameters (nn.Parameter init == clone of the *0 inputs) ----------
        self.ro_abs_free = to(ro_abs_all0)
        self.txy_abs = to(tn_abs_all0)[:, :2]
        self.tz_abs = to(tn_abs_all0)[:, 2]
        self.sz_abs = to(sz_abs_all0)

        # ---- constant buffers --------------------------------------------------------------
        self.ro_abs_all0 = to(ro_abs_all0)
        self.sz_abs_all0 = to(sz_abs_all0)
        self.txy0 = to(tn_abs_all0)[:, :2]

        # sync_size: same-size mask without diagonal, tiled 3x along lanes (channel packing).
        same_off = to(same_size0) * (1.0 - jnp.eye(P, dtype=f32))
        self.same_off3 = jnp.tile(same_off, (1, 3))                           # (P, 3P)

        # sync_rotation: host-precomputed ip_init and structural rotation mask.
        rc0 = to(rotation_class0)
        self.ip_init0 = 2.0 - rc0                                             # (P, P)
        prot0 = to(Prot_rel)[cls[:, None], cls[None, :], 0]                   # (P, P)
        self.mask_rot0 = ((prot0 <= mask_rotation_thres) & (rc0 != 0.0)).astype(f32)

        # sync_translation: robust-loss params as reciprocals.
        self.inv_sigma_gv = 1.0 / to(hyper_params_dict['func.joint_opt_func_gv.sigma_cv'])[cls][:, None]
        self.alpha_gv = to(hyper_params_dict['func.joint_opt_func_gv.alpha_cv'])[cls][:, None]
        sig_ce = to(hyper_params_dict['func.joint_opt_func_gv.sigma_ce'])[cls[:, None], cls[None, :]]
        inv_sig_ge2 = jnp.tile(1.0 / sig_ce, (1, 2))                          # (P, 2P)

        # Absolute GMM: K hoisted to front, normalization folded into coef / isig.
        Pa = to(Pcv_abs)[cls]                                                 # (P, 2, 3, K)
        pi_a = jnp.transpose(Pa[:, :, 0, :], (2, 0, 1))                       # (K, P, 2)
        mu_a = jnp.transpose(Pa[:, :, 1, :], (2, 0, 1))
        sig_a = jnp.sqrt(jnp.transpose(Pa[:, :, 2, :], (2, 0, 1)))
        self.coef_a = pi_a * (_INV_SQRT_2PI / sig_a)
        self.mu_a = mu_a
        self.isig_a = 1.0 / sig_a
        self.num_mix = int(Pa.shape[-1])
        # constant GMM weight at txy0 (hoisted out of the kernel)
        self.w_abs0 = jnp.sum(self.coef_a * jnp.exp(
            -0.5 * ((self.txy0[None] - self.mu_a) * self.isig_a) ** 2), axis=0)   # (P, 2)

        # Relative GMM, channel-packed along lanes: (K, P, 2P), [k, i, c*P+j] layout.
        Pr = to(Pcv_rel)[cls[:, None], cls[None, :]]                          # (P, P, 2, 3, K)
        pack = lambda a: jnp.transpose(a, (3, 0, 2, 1)).reshape(self.num_mix, P, 2 * P)
        pi_r = pack(Pr[:, :, :, 0, :])
        mu_r = pack(Pr[:, :, :, 1, :])
        sig_r = jnp.sqrt(pack(Pr[:, :, :, 2, :]))
        self.coef_r = pi_r * (_INV_SQRT_2PI / sig_r)
        self.mu_r = mu_r
        self.isig_r = 1.0 / sig_r

        rel0 = to(tn_rel_all0)[:, :, :2]                                      # (P, P, 2)
        self.rel0_2 = jnp.concatenate([rel0[:, :, 0], rel0[:, :, 1]], axis=1) # (P, 2P)
        # constant relative GMM weight at rel0, fused with 4/sigma_ce
        w_rel0 = jnp.sum(self.coef_r * jnp.exp(
            -0.5 * ((self.rel0_2[None] - self.mu_r) * self.isig_r) ** 2), axis=0)
        self.w2sig4 = 4.0 * w_rel0 * w_rel0 * inv_sig_ge2                     # (P, 2P)

        iota = jnp.arange(P)
        tri = (iota[None, :] > iota[:, None]).astype(f32)
        self.tri2 = jnp.tile(tri, (1, 2))                                     # (P, 2P)

        # kept for interface parity (unused by the implemented modes)
        self.rel_size0 = to(rel_size0)
        self.Povl = to(Povl)
        self.Prot_abs = to(Prot_abs)

    # ---- per-call input packing (layout plumbing only, all tiny arrays) ---------------------
    def _size_inputs(self, xv):
        P = self.max_parts
        sz = self.sz_abs
        xv_row3 = jnp.tile(xv, 3).reshape(1, 3 * P)
        sz_row3 = sz.T.reshape(1, 3 * P)
        sz_col3 = jnp.concatenate([jnp.broadcast_to(sz[:, c:c + 1], (P, P)) for c in range(3)],
                                  axis=1)
        return (xv_row3, sz, self.sz_abs_all0, sz_row3, sz_col3, self.same_off3)

    def _rot_inputs(self, xv):
        P = self.max_parts
        ro = self.ro_abs_free
        return (xv.reshape(1, P), ro, ro.T, self.ro_abs_all0, self.ip_init0, self.mask_rot0)

    def _tr_inputs(self, xv):
        P = self.max_parts
        txy = self.txy_abs
        xv_row2 = jnp.tile(xv, 2).reshape(1, 2 * P)
        txy_row2 = txy.T.reshape(1, 2 * P)
        txy_col2 = jnp.concatenate([jnp.broadcast_to(txy[:, c:c + 1], (P, P)) for c in range(2)],
                                   axis=1)
        return (xv_row2, txy, self.txy0, self.coef_a, self.mu_a, self.isig_a, self.w_abs0,
                self.inv_sigma_gv, self.alpha_gv, txy_row2, txy_col2,
                self.coef_r, self.mu_r, self.isig_r, self.rel0_2, self.w2sig4, self.tri2)

    # ---- forward ----------------------------------------------------------------------------
    def forward(self, xv, opt_mode, with_collision=True):
        P = self.max_parts
        xv = jnp.asarray(xv, jnp.float32)
        xv_col = xv.reshape(P, 1)

        if opt_mode == 'sync_size':
            kernel = functools.partial(_sync_size_kernel, thres=self.valid_thres)
            return _run_pallas(kernel, (xv_col,) + self._size_inputs(xv))

        if opt_mode == 'sync_rotation':
            kernel = functools.partial(_sync_rotation_kernel, thres=self.valid_thres)
            return _run_pallas(kernel, (xv_col,) + self._rot_inputs(xv))

        if opt_mode == 'sync_translation':
            if with_collision:
                # TODO(synk): collision term requires utils.params2box / overlap.overlappingInfo.
                raise NotImplementedError("collision term not available (external deps missing)")
            kernel = functools.partial(_sync_translation_kernel, thres=self.valid_thres,
                                       num_mix=self.num_mix)
            return _run_pallas(kernel, (xv_col,) + self._tr_inputs(xv))

        if opt_mode == 'collision':
            # TODO(synk): penalize_collision depends on utils.params2box / overlap.overlappingInfo.
            raise NotImplementedError("collision mode not available (external deps missing)")

        raise AssertionError('Not Implemented')

    def forward_all(self, xv):
        """Fused: all three sync losses in one pallas_call (amortizes launch overhead)."""
        P = self.max_parts
        xv = jnp.asarray(xv, jnp.float32)
        inputs = ((xv.reshape(P, 1),) + self._size_inputs(xv)
                  + self._rot_inputs(xv) + self._tr_inputs(xv))
        kernel = functools.partial(_fused_kernel, thres=self.valid_thres, num_mix=self.num_mix)
        return _run_pallas(kernel, inputs, num_outputs=3)

    __call__ = forward


# --------------------------------------------------------------------------- numpy references

def _np_gmm(x, pi, mu, sigma):
    x = x.reshape(-1, 1)
    z = (x - mu) / sigma
    y = 1.0 / (sigma * np.sqrt(2 * np.pi)) * np.exp(-0.5 * z * z)
    return np.sum(y * pi, axis=1)


def ref_sync_size(xv, sz, sz0, same0, thres=0.5):
    valid = np.where(xv > thres)[0]
    n = len(valid)
    if n <= 1:
        return 0.0
    szv, szv0 = sz[valid], sz0[valid]
    ss = same0[np.ix_(valid, valid)]
    ss = (ss - np.diag(np.diag(ss)))[:, :, None]
    d = szv - szv0
    lv = np.sum(d * d) / n
    dr = (szv[:, None, :] - szv[None, :, :]) * ss
    le = np.sum(dr * dr) / (np.sum(ss) + 1e-6)
    return lv + 10 * le


def ref_sync_rotation(xv, ro_free, ro0, rc0, Prot_rel, E, thres=0.5, mthres=0.15):
    valid = np.where(xv > thres)[0]
    n = len(valid)
    if n <= 1:
        return 0.0
    ro = ro_free / np.linalg.norm(ro_free, axis=1, keepdims=True)
    rv, rv0 = ro[valid], ro0[valid]
    ip = np.abs(rv @ rv.T)
    ip0 = (2 - rc0)[np.ix_(valid, valid)]
    prot = np.repeat(np.repeat(Prot_rel, E, 0), E, 1)
    mr = (prot[np.ix_(valid, valid)][:, :, 0] <= mthres).astype(np.float64)
    mr = mr * (rc0[np.ix_(valid, valid)] != 0).astype(np.float64)
    le = np.sum(np.abs((ip - ip0) * mr)) / np.sum(mr)
    d = rv - rv0
    lv = np.sum(d * d) / n
    return lv + 100 * le


def ref_sync_translation(xv, txy_abs, tn_abs0, tn_rel0, Pcv_abs, Pcv_rel,
                         sigma_cv, alpha_cv, sigma_ce, E, thres=0.5):
    mask = (xv > thres).astype(np.float64)[:, None]
    valid = np.where(xv > thres)[0]
    n = len(valid)
    if n <= 1:
        return 0.0
    txy0 = tn_abs0[:, :2].astype(np.float64)
    txyrel0 = tn_rel0[:, :, :2].astype(np.float64)
    txy_abs = txy_abs.astype(np.float64)
    sigma_gv = np.repeat(sigma_cv, E)[:, None]
    alpha_gv = np.repeat(alpha_cv, E)[:, None]
    sigma_ge = np.repeat(np.repeat(sigma_ce, E, 0), E, 1)[:, :, None]
    weight_abs = np.zeros_like(txy0)
    pdf_abs = np.zeros_like(txy0)
    pa = Pcv_abs[valid // E]
    for c in range(2):
        weight_abs[valid, c] = _np_gmm(txy0[valid, c], pa[:, c, 0], pa[:, c, 1], np.sqrt(pa[:, c, 2]))
        pdf_abs[valid, c] = _np_gmm(txy_abs[valid, c], pa[:, c, 0], pa[:, c, 1], np.sqrt(pa[:, c, 2]))
    loss_v_prior = np.sum(-np.log(pdf_abs[valid] + 1e-6))
    d = txy_abs - txy0
    d = d * d * mask / sigma_gv
    loss_v_recon = np.sum(d * d / (d * d + alpha_gv) * weight_abs)
    txy_rel = txy_abs[None, :, :] - txy_abs[:, None, :]
    weight_rel = np.zeros_like(txyrel0)
    pdf_rel = np.zeros_like(txy_rel)
    idx2 = np.array(list(itertools.combinations(valid, 2)))
    ii, jj = idx2[:, 0], idx2[:, 1]
    pr = Pcv_rel[ii // E, jj // E]
    for c in range(2):
        weight_rel[ii, jj, c] = _np_gmm(txyrel0[ii, jj, c], pr[:, c, 0], pr[:, c, 1], np.sqrt(pr[:, c, 2]))
        pdf_rel[ii, jj, c] = _np_gmm(txy_rel[ii, jj, c], pr[:, c, 0], pr[:, c, 1], np.sqrt(pr[:, c, 2]))
    loss_e_prior = np.sum(-np.log(pdf_rel[ii, jj] + 1e-6))
    dge = txy_rel - txyrel0
    dge = dge * dge * (mask * mask.T)[:, :, None] / sigma_ge
    loss_e_recon = np.sum(dge * weight_rel * weight_rel * 4)
    return (loss_v_recon / n * 2 + loss_v_prior / n * 0.01
            + loss_e_recon / (n * n - n) / 2 * 100 + loss_e_prior / (n * n - n) / 2 * 0.1)


# --------------------------------------------------------------------------- main

if __name__ == "__main__":
    key = jax.random.PRNGKey(0)
    ks = jax.random.split(key, 20)
    C, E, K = 4, 4, 4            # num_class, num_each_class, GMM mixtures
    P = C * E

    ang = jax.random.uniform(ks[0], (P,), minval=0.0, maxval=2.0 * np.pi)
    ro_abs_all0 = jnp.stack([jnp.cos(ang), jnp.sin(ang)], axis=1)               # (P,2)
    tn_abs_all0 = jax.random.uniform(ks[1], (P, 3), minval=-2.0, maxval=2.0)    # (P,3)
    sz_abs_all0 = jax.random.uniform(ks[2], (P, 3), minval=0.5, maxval=2.0)     # (P,3)
    rotation_class0 = jax.random.randint(ks[3], (P, P), 0, 3).astype(jnp.float32)
    rotation_class0 = rotation_class0.at[0, 1].set(1.0)
    tn_rel_all0 = jax.random.uniform(ks[4], (P, P, 3), minval=-2.0, maxval=2.0)
    same_size0 = (jax.random.uniform(ks[5], (P, P)) > 0.5).astype(jnp.float32)
    rel_size0 = jnp.zeros((P, P, 3), jnp.float32)

    def make_gmm_params(k, prefix):
        k1, k2, k3 = jax.random.split(k, 3)
        pi = jax.random.uniform(k1, prefix + (K,), minval=0.1, maxval=1.0)
        pi = pi / jnp.sum(pi, axis=-1, keepdims=True)
        mu = jax.random.uniform(k2, prefix + (K,), minval=-1.5, maxval=1.5)
        var = jax.random.uniform(k3, prefix + (K,), minval=0.2, maxval=1.0)
        return jnp.stack([pi, mu, var], axis=len(prefix))                       # (..., 3, K)

    Pcv_abs = make_gmm_params(ks[6], (C, 2))          # (C, 2, 3, K)
    Pcv_rel = make_gmm_params(ks[7], (C, C, 2))       # (C, C, 2, 3, K)
    Povl = (jax.random.uniform(ks[8], (C, C)) > 0.5).astype(jnp.float32)
    Prot_abs = jax.random.uniform(ks[9], (C, 3))
    Prot_rel = jax.random.uniform(ks[10], (C, C, 3), minval=0.0, maxval=0.3)
    Prot_rel = Prot_rel.at[0, 0, 0].set(0.05)

    hyper = {
        'func.joint_opt_func_gv.sigma_cv': jax.random.uniform(ks[11], (C,), minval=0.05, maxval=0.2),
        'func.joint_opt_func_gv.alpha_cv': jax.random.uniform(ks[12], (C,), minval=0.5, maxval=1.5),
        'func.joint_opt_func_gv.sigma_ce': jax.random.uniform(ks[13], (C, C), minval=0.05, maxval=0.2),
        'func.joint_opt_func_gv.alpha_ce': jax.random.uniform(ks[14], (C, C), minval=0.5, maxval=1.5),
    }

    xv = jax.random.uniform(ks[15], (P,))
    xv = xv.at[0].set(0.9).at[1].set(0.8)             # guarantee > 1 valid object

    solver = SolverGvPallas(hyper, ro_abs_all0, tn_abs_all0, sz_abs_all0, rotation_class0,
                            tn_rel_all0, same_size0, rel_size0, Pcv_abs, Pcv_rel, Povl,
                            Prot_abs, Prot_rel, C, E)

    # Perturb the optimizable parameters (as an optimizer step would).
    solver.txy_abs = solver.txy_abs + 0.05 * jax.random.normal(ks[16], (P, 2))
    solver.sz_abs = solver.sz_abs + 0.05 * jax.random.normal(ks[17], (P, 3))
    solver.ro_abs_free = solver.ro_abs_free + 0.05 * jax.random.normal(ks[18], (P, 2))

    # Fused path (single pallas_call for all three losses) + per-mode path.
    loss_sz_f, loss_ro_f, loss_tr_f = solver.forward_all(xv)
    loss_sz = solver(xv, 'sync_size')
    loss_ro = solver(xv, 'sync_rotation')
    loss_tr = solver(xv, 'sync_translation', with_collision=False)
    jax.block_until_ready((loss_sz_f, loss_ro_f, loss_tr_f, loss_sz, loss_ro, loss_tr))

    # numpy reference (mirrors the torch code with boolean indexing / itertools.combinations)
    A = np.asarray
    ref_sz = ref_sync_size(A(xv), A(solver.sz_abs), A(sz_abs_all0), A(same_size0))
    ref_ro = ref_sync_rotation(A(xv), A(solver.ro_abs_free), A(ro_abs_all0),
                               A(rotation_class0), A(Prot_rel), E)
    ref_tr = ref_sync_translation(A(xv), A(solver.txy_abs), A(tn_abs_all0), A(tn_rel_all0),
                                  A(Pcv_abs), A(Pcv_rel),
                                  A(hyper['func.joint_opt_func_gv.sigma_cv']),
                                  A(hyper['func.joint_opt_func_gv.alpha_cv']),
                                  A(hyper['func.joint_opt_func_gv.sigma_ce']), E)

    for got, want in [(loss_sz, ref_sz), (loss_ro, ref_ro), (loss_tr, ref_tr),
                      (loss_sz_f, ref_sz), (loss_ro_f, ref_ro), (loss_tr_f, ref_tr)]:
        np.testing.assert_allclose(float(got), want, rtol=3e-3, atol=1e-3)

    print("KERNEL_OK")
</pallas_src>

<mosaic_0001>
module attributes {stable_mosaic.version = 11 : i64} {
  func.func @_fused_kernel(%arg0: memref<16x1xf32, #tpu.memory_space<vmem>>, %arg1: memref<1x48xf32, #tpu.memory_space<vmem>>, %arg2: memref<16x3xf32, #tpu.memory_space<vmem>>, %arg3: memref<16x3xf32, #tpu.memory_space<vmem>>, %arg4: memref<1x48xf32, #tpu.memory_space<vmem>>, %arg5: memref<16x48xf32, #tpu.memory_space<vmem>>, %arg6: memref<16x48xf32, #tpu.memory_space<vmem>>, %arg7: memref<1x16xf32, #tpu.memory_space<vmem>>, %arg8: memref<16x2xf32, #tpu.memory_space<vmem>>, %arg9: memref<2x16xf32, #tpu.memory_space<vmem>>, %arg10: memref<16x2xf32, #tpu.memory_space<vmem>>, %arg11: memref<16x16xf32, #tpu.memory_space<vmem>>, %arg12: memref<16x16xf32, #tpu.memory_space<vmem>>, %arg13: memref<1x32xf32, #tpu.memory_space<vmem>>, %arg14: memref<16x2xf32, #tpu.memory_space<vmem>>, %arg15: memref<16x2xf32, #tpu.memory_space<vmem>>, %arg16: memref<4x16x2xf32, #tpu.memory_space<vmem>>, %arg17: memref<4x16x2xf32, #tpu.memory_space<vmem>>, %arg18: memref<4x16x2xf32, #tpu.memory_space<vmem>>, %arg19: memref<16x2xf32, #tpu.memory_space<vmem>>, %arg20: memref<16x1xf32, #tpu.memory_space<vmem>>, %arg21: memref<16x1xf32, #tpu.memory_space<vmem>>, %arg22: memref<1x32xf32, #tpu.memory_space<vmem>>, %arg23: memref<16x32xf32, #tpu.memory_space<vmem>>, %arg24: memref<4x16x32xf32, #tpu.memory_space<vmem>>, %arg25: memref<4x16x32xf32, #tpu.memory_space<vmem>>, %arg26: memref<4x16x32xf32, #tpu.memory_space<vmem>>, %arg27: memref<16x32xf32, #tpu.memory_space<vmem>>, %arg28: memref<16x32xf32, #tpu.memory_space<vmem>>, %arg29: memref<16x32xf32, #tpu.memory_space<vmem>>, %arg30: memref<1x1xf32, #tpu.memory_space<vmem>>, %arg31: memref<1x1xf32, #tpu.memory_space<vmem>>, %arg32: memref<1x1xf32, #tpu.memory_space<vmem>>) attributes {dimension_semantics = [], scalar_prefetch = 0 : i64, scratch_operands = 0 : i64, tpu.core_type = #tpu.core_type<tc>} {
    %c0 = arith.constant 0 : index
    %c0_0 = arith.constant 0 : index
    %0 = vector.load %arg0[%c0, %c0_0] : memref<16x1xf32, #tpu.memory_space<vmem>>, vector<16x1xf32>
    %cst = arith.constant 5.000000e-01 : f32
    %1 = vector.broadcast %cst : f32 to vector<16x1xf32>
    %2 = arith.cmpf ogt, %0, %1 : vector<16x1xf32>
    %3 = arith.extui %2 : vector<16x1xi1> to vector<16x1xi32>
    %4 = arith.sitofp %3 : vector<16x1xi32> to vector<16x1xf32>
    %5 = vector.shape_cast %4 : vector<16x1xf32> to vector<1x16x1xf32>
    %cst_1 = arith.constant dense<0.000000e+00> : vector<1xf32>
    %6 = vector.multi_reduction <add>, %5, %cst_1 [1, 2] : vector<1x16x1xf32> to vector<1xf32>
    %7 = vector.shape_cast %6 : vector<1xf32> to vector<1x1x1xf32>
    %8 = vector.extract %7[0, 0, 0] : f32 from vector<1x1x1xf32>
    %9 = vector.broadcast %8 : f32 to vector<1x1xf32>
    %cst_2 = arith.constant 2.000000e+00 : f32
    %10 = vector.broadcast %cst_2 : f32 to vector<1x1xf32>
    %11 = arith.maximumf %9, %10 : vector<1x1xf32>
    %c0_3 = arith.constant 0 : index
    %c0_4 = arith.constant 0 : index
    %12 = vector.load %arg1[%c0_3, %c0_4] : memref<1x48xf32, #tpu.memory_space<vmem>>, vector<1x48xf32>
    %cst_5 = arith.constant 5.000000e-01 : f32
    %13 = vector.broadcast %cst_5 : f32 to vector<1x48xf32>
    %14 = arith.cmpf ogt, %12, %13 : vector<1x48xf32>
    %15 = arith.extui %14 : vector<1x48xi1> to vector<1x48xi32>
    %16 = arith.sitofp %15 : vector<1x48xi32> to vector<1x48xf32>
    %c0_6 = arith.constant 0 : index
    %c0_7 = arith.constant 0 : index
    %17 = vector.load %arg2[%c0_6, %c0_7] : memref<16x3xf32, #tpu.memory_space<vmem>>, vector<16x3xf32>
    %c0_8 = arith.constant 0 : index
    %c0_9 = arith.constant 0 : index
    %18 = vector.load %arg3[%c0_8, %c0_9] : memref<16x3xf32, #tpu.memory_space<vmem>>, vector<16x3xf32>
    %19 = arith.subf %17, %18 : vector<16x3xf32>
    %20 = arith.mulf %19, %19 : vector<16x3xf32>
    %21 = vector.broadcast %4 : vector<16x1xf32> to vector<16x3xf32>
    %22 = arith.mulf %20, %21 : vector<16x3xf32>
    %23 = vector.shape_cast %22 : vector<16x3xf32> to vector<1x16x3xf32>
    %cst_10 = arith.constant dense<0.000000e+00> : vector<1xf32>
    %24 = vector.multi_reduction <add>, %23, %cst_10 [1, 2] : vector<1x16x3xf32> to vector<1xf32>
    %25 = vector.shape_cast %24 : vector<1xf32> to vector<1x1x1xf32>
    %26 = vector.extract %25[0, 0, 0] : f32 from vector<1x1x1xf32>
    %27 = vector.broadcast %26 : f32 to vector<1x1xf32>
    %28 = arith.divf %27, %11 : vector<1x1xf32>
    %c0_11 = arith.constant 0 : index
    %c0_12 = arith.constant 0 : index
    %29 = vector.load %arg6[%c0_11, %c0_12] : memref<16x48xf32, #tpu.memory_space<vmem>>, vector<16x48xf32>
    %30 = vector.broadcast %4 : vector<16x1xf32> to vector<16x48xf32>
    %31 = arith.mulf %29, %30 : vector<16x48xf32>
    %32 = vector.broadcast %16 : vector<1x48xf32> to vector<16x48xf32>
    %33 = arith.mulf %31, %32 : vector<16x48xf32>
    %c0_13 = arith.constant 0 : index
    %c0_14 = arith.constant 0 : index
    %34 = vector.load %arg4[%c0_13, %c0_14] : memref<1x48xf32, #tpu.memory_space<vmem>>, vector<1x48xf32>
    %c0_15 = arith.constant 0 : index
    %c0_16 = arith.constant 0 : index
    %35 = vector.load %arg5[%c0_15, %c0_16] : memref<16x48xf32, #tpu.memory_space<vmem>>, vector<16x48xf32>
    %36 = vector.broadcast %34 : vector<1x48xf32> to vector<16x48xf32>
    %37 = arith.subf %36, %35 : vector<16x48xf32>
    %38 = arith.mulf %37, %33 : vector<16x48xf32>
    %39 = arith.mulf %38, %38 : vector<16x48xf32>
    %40 = vector.shape_cast %39 : vector<16x48xf32> to vector<1x16x48xf32>
    %cst_17 = arith.constant dense<0.000000e+00> : vector<1xf32>
    %41 = vector.multi_reduction <add>, %40, %cst_17 [1, 2] : vector<1x16x48xf32> to vector<1xf32>
    %42 = vector.shape_cast %41 : vector<1xf32> to vector<1x1x1xf32>
    %43 = vector.extract %42[0, 0, 0] : f32 from vector<1x1x1xf32>
    %44 = vector.broadcast %43 : f32 to vector<1x1xf32>
    %45 = vector.shape_cast %33 : vector<16x48xf32> to vector<1x16x48xf32>
    %cst_18 = arith.constant dense<0.000000e+00> : vector<1xf32>
    %46 = vector.multi_reduction <add>, %45, %cst_18 [1, 2] : vector<1x16x48xf32> to vector<1xf32>
    %47 = vector.shape_cast %46 : vector<1xf32> to vector<1x1x1xf32>
    %48 = vector.extract %47[0, 0, 0] : f32 from vector<1x1x1xf32>
    %49 = vector.broadcast %48 : f32 to vector<1x1xf32>
    %cst_19 = arith.constant 0.333333343 : f32
    %50 = vector.broadcast %cst_19 : f32 to vector<1x1xf32>
    %51 = arith.mulf %49, %50 : vector<1x1xf32>
    %cst_20 = arith.constant 9.99999997E-7 : f32
    %52 = vector.broadcast %cst_20 : f32 to vector<1x1xf32>
    %53 = arith.addf %51, %52 : vector<1x1xf32>
    %54 = arith.divf %44, %53 : vector<1x1xf32>
    %cst_21 = arith.constant 1.000000e+01 : f32
    %55 = vector.broadcast %cst_21 : f32 to vector<1x1xf32>
    %56 = arith.mulf %55, %54 : vector<1x1xf32>
    %57 = arith.addf %28, %56 : vector<1x1xf32>
    %cst_22 = arith.constant 1.000000e+00 : f32
    %58 = vector.broadcast %cst_22 : f32 to vector<1x1xf32>
    %59 = arith.cmpf ogt, %9, %58 : vector<1x1xf32>
    %cst_23 = arith.constant 0.000000e+00 : f32
    %60 = vector.broadcast %cst_23 : f32 to vector<1x1xf32>
    %61 = arith.select %59, %57, %60 : vector<1x1xi1>, vector<1x1xf32>
    %c0_24 = arith.constant 0 : index
    %c0_25 = arith.constant 0 : index
    %62 = vector.load %arg30[%c0_24, %c0_25] : memref<1x1xf32, #tpu.memory_space<vmem>>, vector<1x1xf32>
    tpu.vector_store %arg30[%c0_24, %c0_25], %61 {strides = array<i32>} : memref<1x1xf32, #tpu.memory_space<vmem>>, vector<1x1xf32>,
    %c0_26 = arith.constant 0 : index
    %c0_27 = arith.constant 0 : index
    %63 = vector.load %arg7[%c0_26, %c0_27] : memref<1x16xf32, #tpu.memory_space<vmem>>, vector<1x16xf32>
    %cst_28 = arith.constant 5.000000e-01 : f32
    %64 = vector.broadcast %cst_28 : f32 to vector<1x16xf32>
    %65 = arith.cmpf ogt, %63, %64 : vector<1x16xf32>
    %66 = arith.extui %65 : vector<1x16xi1> to vector<1x16xi32>
    %67 = arith.sitofp %66 : vector<1x16xi32> to vector<1x16xf32>
    %c0_29 = arith.constant 0 : index
    %c0_30 = arith.constant 0 : index
    %68 = vector.load %arg8[%c0_29, %c0_30] : memref<16x2xf32, #tpu.memory_space<vmem>>, vector<16x2xf32>
    %c0_31 = arith.constant 0 : index
    %c0_32 = arith.constant 0 : index
    %69 = vector.load %arg9[%c0_31, %c0_32] : memref<2x16xf32, #tpu.memory_space<vmem>>, vector<2x16xf32>
    %70 = vector.extract_strided_slice %68 {offsets = [0, 0], sizes = [16, 1], strides = [1, 1]} : vector<16x2xf32> to vector<16x1xf32>
    %71 = vector.extract_strided_slice %68 {offsets = [0, 0], sizes = [16, 1], strides = [1, 1]} : vector<16x2xf32> to vector<16x1xf32>
    %72 = arith.mulf %70, %71 : vector<16x1xf32>
    %73 = vector.extract_strided_slice %68 {offsets = [0, 1], sizes = [16, 1], strides = [1, 1]} : vector<16x2xf32> to vector<16x1xf32>
    %74 = vector.extract_strided_slice %68 {offsets = [0, 1], sizes = [16, 1], strides = [1, 1]} : vector<16x2xf32> to vector<16x1xf32>
    %75 = arith.mulf %73, %74 : vector<16x1xf32>
    %76 = arith.addf %72, %75 : vector<16x1xf32>
    %77 = math.rsqrt %76 : vector<16x1xf32>
    %78 = vector.extract_strided_slice %69 {offsets = [0, 0], sizes = [1, 16], strides = [1, 1]} : vector<2x16xf32> to vector<1x16xf32>
    %79 = vector.extract_strided_slice %69 {offsets = [0, 0], sizes = [1, 16], strides = [1, 1]} : vector<2x16xf32> to vector<1x16xf32>
    %80 = arith.mulf %78, %79 : vector<1x16xf32>
    %81 = vector.extract_strided_slice %69 {offsets = [1, 0], sizes = [1, 16], strides = [1, 1]} : vector<2x16xf32> to vector<1x16xf32>
    %82 = vector.extract_strided_slice %69 {offsets = [1, 0], sizes = [1, 16], strides = [1, 1]} : vector<2x16xf32> to vector<1x16xf32>
    %83 = arith.mulf %81, %82 : vector<1x16xf32>
    %84 = arith.addf %80, %83 : vector<1x16xf32>
    %85 = math.rsqrt %84 : vector<1x16xf32>
    %86 = vector.extract_strided_slice %68 {offsets = [0, 0], sizes = [16, 1], strides = [1, 1]} : vector<16x2xf32> to vector<16x1xf32>
    %87 = arith.mulf %86, %77 : vector<16x1xf32>
    %88 = vector.extract_strided_slice %69 {offsets = [0, 0], sizes = [1, 16], strides = [1, 1]} : vector<2x16xf32> to vector<1x16xf32>
    %89 = arith.mulf %88, %85 : vector<1x16xf32>
    %90 = vector.broadcast %87 : vector<16x1xf32> to vector<16x16xf32>
    %91 = vector.broadcast %89 : vector<1x16xf32> to vector<16x16xf32>
    %92 = arith.mulf %90, %91 : vector<16x16xf32>
    %93 = vector.extract_strided_slice %68 {offsets = [0, 1], sizes = [16, 1], strides = [1, 1]} : vector<16x2xf32> to vector<16x1xf32>
    %94 = arith.mulf %93, %77 : vector<16x1xf32>
    %95 = vector.extract_strided_slice %69 {offsets = [1, 0], sizes = [1, 16], strides = [1, 1]} : vector<2x16xf32> to vector<1x16xf32>
    %96 = arith.mulf %95, %85 : vector<1x16xf32>
    %97 = vector.broadcast %94 : vector<16x1xf32> to vector<16x16xf32>
    %98 = vector.broadcast %96 : vector<1x16xf32> to vector<16x16xf32>
    %99 = arith.mulf %97, %98 : vector<16x16xf32>
    %100 = arith.addf %92, %99 : vector<16x16xf32>
    %101 = math.absf %100 : vector<16x16xf32>
    %c0_33 = arith.constant 0 : index
    %c0_34 = arith.constant 0 : index
    %102 = vector.load %arg12[%c0_33, %c0_34] : memref<16x16xf32, #tpu.memory_space<vmem>>, vector<16x16xf32>
    %103 = vector.broadcast %4 : vector<16x1xf32> to vector<16x16xf32>
    %104 = arith.mulf %102, %103 : vector<16x16xf32>
    %105 = vector.broadcast %67 : vector<1x16xf32> to vector<16x16xf32>
    %106 = arith.mulf %104, %105 : vector<16x16xf32>
    %c0_35 = arith.constant 0 : index
    %c0_36 = arith.constant 0 : index
    %107 = vector.load %arg11[%c0_35, %c0_36] : memref<16x16xf32, #tpu.memory_space<vmem>>, vector<16x16xf32>
    %108 = arith.subf %101, %107 : vector<16x16xf32>
    %109 = math.absf %108 : vector<16x16xf32>
    %110 = arith.mulf %109, %106 : vector<16x16xf32>
    %111 = vector.shape_cast %110 : vector<16x16xf32> to vector<1x16x16xf32>
    %cst_37 = arith.constant dense<0.000000e+00> : vector<1xf32>
    %112 = vector.multi_reduction <add>, %111, %cst_37 [1, 2] : vector<1x16x16xf32> to vector<1xf32>
    %113 = vector.shape_cast %112 : vector<1xf32> to vector<1x1x1xf32>
    %114 = vector.extract %113[0, 0, 0] : f32 from vector<1x1x1xf32>
    %115 = vector.broadcast %114 : f32 to vector<1x1xf32>
    %116 = vector.shape_cast %106 : vector<16x16xf32> to vector<1x16x16xf32>
    %cst_38 = arith.constant dense<0.000000e+00> : vector<1xf32>
    %117 = vector.multi_reduction <add>, %116, %cst_38 [1, 2] : vector<1x16x16xf32> to vector<1xf32>
    %118 = vector.shape_cast %117 : vector<1xf32> to vector<1x1x1xf32>
    %119 = vector.extract %118[0, 0, 0] : f32 from vector<1x1x1xf32>
    %120 = vector.broadcast %119 : f32 to vector<1x1xf32>
    %cst_39 = arith.constant 9.99999997E-7 : f32
    %121 = vector.broadcast %cst_39 : f32 to vector<1x1xf32>
    %122 = arith.addf %120, %121 : vector<1x1xf32>
    %123 = arith.divf %115, %122 : vector<1x1xf32>
    %124 = vector.broadcast %77 : vector<16x1xf32> to vector<16x2xf32>
    %125 = arith.mulf %68, %124 : vector<16x2xf32>
    %c0_40 = arith.constant 0 : index
    %c0_41 = arith.constant 0 : index
    %126 = vector.load %arg10[%c0_40, %c0_41] : memref<16x2xf32, #tpu.memory_space<vmem>>, vector<16x2xf32>
    %127 = arith.subf %125, %126 : vector<16x2xf32>
    %128 = arith.mulf %127, %127 : vector<16x2xf32>
    %129 = vector.broadcast %4 : vector<16x1xf32> to vector<16x2xf32>
    %130 = arith.mulf %128, %129 : vector<16x2xf32>
    %131 = vector.shape_cast %130 : vector<16x2xf32> to vector<1x16x2xf32>
    %cst_42 = arith.constant dense<0.000000e+00> : vector<1xf32>
    %132 = vector.multi_reduction <add>, %131, %cst_42 [1, 2] : vector<1x16x2xf32> to vector<1xf32>
    %133 = vector.shape_cast %132 : vector<1xf32> to vector<1x1x1xf32>
    %134 = vector.extract %133[0, 0, 0] : f32 from vector<1x1x1xf32>
    %135 = vector.broadcast %134 : f32 to vector<1x1xf32>
    %136 = arith.divf %135, %11 : vector<1x1xf32>
    %cst_43 = arith.constant 1.000000e+02 : f32
    %137 = vector.broadcast %cst_43 : f32 to vector<1x1xf32>
    %138 = arith.mulf %137, %123 : vector<1x1xf32>
    %139 = arith.addf %136, %138 : vector<1x1xf32>
    %cst_44 = arith.constant 1.000000e+00 : f32
    %140 = vector.broadcast %cst_44 : f32 to vector<1x1xf32>
    %141 = arith.cmpf ogt, %9, %140 : vector<1x1xf32>
    %cst_45 = arith.constant 0.000000e+00 : f32
    %142 = vector.broadcast %cst_45 : f32 to vector<1x1xf32>
    %143 = arith.select %141, %139, %142 : vector<1x1xi1>, vector<1x1xf32>
    %c0_46 = arith.constant 0 : index
    %c0_47 = arith.constant 0 : index
    %144 = vector.load %arg31[%c0_46, %c0_47] : memref<1x1xf32, #tpu.memory_space<vmem>>, vector<1x1xf32>
    tpu.vector_store %arg31[%c0_46, %c0_47], %143 {strides = array<i32>} : memref<1x1xf32, #tpu.memory_space<vmem>>, vector<1x1xf32>,
    %c0_48 = arith.constant 0 : index
    %c0_49 = arith.constant 0 : index
    %145 = vector.load %arg13[%c0_48, %c0_49] : memref<1x32xf32, #tpu.memory_space<vmem>>, vector<1x32xf32>
    %cst_50 = arith.constant 5.000000e-01 : f32
    %146 = vector.broadcast %cst_50 : f32 to vector<1x32xf32>
    %147 = arith.cmpf ogt, %145, %146 : vector<1x32xf32>
    %148 = arith.extui %147 : vector<1x32xi1> to vector<1x32xi32>
    %149 = arith.sitofp %148 : vector<1x32xi32> to vector<1x32xf32>
    %c0_51 = arith.constant 0 : index
    %c0_52 = arith.constant 0 : index
    %150 = vector.load %arg14[%c0_51, %c0_52] : memref<16x2xf32, #tpu.memory_space<vmem>>, vector<16x2xf32>
    %cst_53 = arith.constant 0.000000e+00 : f32
    %151 = vector.broadcast %cst_53 : f32 to vector<16x2xf32>
    %c0_54 = arith.constant 0 : index
    %c0_55 = arith.constant 0 : index
    %c0_56 = arith.constant 0 : index
    %152 = vector.load %arg17[%c0_54, %c0_55, %c0_56] : memref<4x16x2xf32, #tpu.memory_space<vmem>>, vector<1x16x2xf32>
    %153 = vector.shape_cast %152 : vector<1x16x2xf32> to vector<16x2xf32>
    %154 = arith.subf %150, %153 : vector<16x2xf32>
    %c0_57 = arith.constant 0 : index
    %c0_58 = arith.constant 0 : index
    %c0_59 = arith.constant 0 : index
    %155 = vector.load %arg18[%c0_57, %c0_58, %c0_59] : memref<4x16x2xf32, #tpu.memory_space<vmem>>, vector<1x16x2xf32>
    %156 = vector.shape_cast %155 : vector<1x16x2xf32> to vector<16x2xf32>
    %157 = arith.mulf %154, %156 : vector<16x2xf32>
    %c0_60 = arith.constant 0 : index
    %c0_61 = arith.constant 0 : index
    %c0_62 = arith.constant 0 : index
    %158 = vector.load %arg16[%c0_60, %c0_61, %c0_62] : memref<4x16x2xf32, #tpu.memory_space<vmem>>, vector<1x16x2xf32>
    %159 = vector.shape_cast %158 : vector<1x16x2xf32> to vector<16x2xf32>
    %cst_63 = arith.constant -5.000000e-01 : f32
    %160 = vector.broadcast %cst_63 : f32 to vector<16x2xf32>
    %161 = arith.mulf %160, %157 : vector<16x2xf32>
    %162 = arith.mulf %161, %157 : vector<16x2xf32>
    %163 = math.exp %162 : vector<16x2xf32>
    %164 = arith.mulf %159, %163 : vector<16x2xf32>
    %165 = arith.addf %151, %164 : vector<16x2xf32>
    %c1 = arith.constant 1 : index
    %c0_64 = arith.constant 0 : index
    %c0_65 = arith.constant 0 : index
    %166 = vector.load %arg17[%c1, %c0_64, %c0_65] : memref<4x16x2xf32, #tpu.memory_space<vmem>>, vector<1x16x2xf32>
    %167 = vector.shape_cast %166 : vector<1x16x2xf32> to vector<16x2xf32>
    %168 = arith.subf %150, %167 : vector<16x2xf32>
    %c1_66 = arith.constant 1 : index
    %c0_67 = arith.constant 0 : index
    %c0_68 = arith.constant 0 : index
    %169 = vector.load %arg18[%c1_66, %c0_67, %c0_68] : memref<4x16x2xf32, #tpu.memory_space<vmem>>, vector<1x16x2xf32>
    %170 = vector.shape_cast %169 : vector<1x16x2xf32> to vector<16x2xf32>
    %171 = arith.mulf %168, %170 : vector<16x2xf32>
    %c1_69 = arith.constant 1 : index
    %c0_70 = arith.constant 0 : index
    %c0_71 = arith.constant 0 : index
    %172 = vector.load %arg16[%c1_69, %c0_70, %c0_71] : memref<4x16x2xf32, #tpu.memory_space<vmem>>, vector<1x16x2xf32>
    %173 = vector.shape_cast %172 : vector<1x16x2xf32> to vector<16x2xf32>
    %cst_72 = arith.constant -5.000000e-01 : f32
    %174 = vector.broadcast %cst_72 : f32 to vector<16x2xf32>
    %175 = arith.mulf %174, %171 : vector<16x2xf32>
    %176 = arith.mulf %175, %171 : vector<16x2xf32>
    %177 = math.exp %176 : vector<16x2xf32>
    %178 = arith.mulf %173, %177 : vector<16x2xf32>
    %179 = arith.addf %165, %178 : vector<16x2xf32>
    %c2 = arith.constant 2 : index
    %c0_73 = arith.constant 0 : index
    %c0_74 = arith.constant 0 : index
    %180 = vector.load %arg17[%c2, %c0_73, %c0_74] : memref<4x16x2xf32, #tpu.memory_space<vmem>>, vector<1x16x2xf32>
    %181 = vector.shape_cast %180 : vector<1x16x2xf32> to vector<16x2xf32>
    %182 = arith.subf %150, %181 : vector<16x2xf32>
    %c2_75 = arith.constant 2 : index
    %c0_76 = arith.constant 0 : index
    %c0_77 = arith.constant 0 : index
    %183 = vector.load %arg18[%c2_75, %c0_76, %c0_77] : memref<4x16x2xf32, #tpu.memory_space<vmem>>, vector<1x16x2xf32>
    %184 = vector.shape_cast %183 : vector<1x16x2xf32> to vector<16x2xf32>
    %185 = arith.mulf %182, %184 : vector<16x2xf32>
    %c2_78 = arith.constant 2 : index
    %c0_79 = arith.constant 0 : index
    %c0_80 = arith.constant 0 : index
    %186 = vector.load %arg16[%c2_78, %c0_79, %c0_80] : memref<4x16x2xf32, #tpu.memory_space<vmem>>, vector<1x16x2xf32>
    %187 = vector.shape_cast %186 : vector<1x16x2xf32> to vector<16x2xf32>
    %cst_81 = arith.constant -5.000000e-01 : f32
    %188 = vector.broadcast %cst_81 : f32 to vector<16x2xf32>
    %189 = arith.mulf %188, %185 : vector<16x2xf32>
    %190 = arith.mulf %189, %185 : vector<16x2xf32>
    %191 = math.exp %190 : vector<16x2xf32>
    %192 = arith.mulf %187, %191 : vector<16x2xf32>
    %193 = arith.addf %179, %192 : vector<16x2xf32>
    %c3 = arith.constant 3 : index
    %c0_82 = arith.constant 0 : index
    %c0_83 = arith.constant 0 : index
    %194 = vector.load %arg17[%c3, %c0_82, %c0_83] : memref<4x16x2xf32, #tpu.memory_space<vmem>>, vector<1x16x2xf32>
    %195 = vector.shape_cast %194 : vector<1x16x2xf32> to vector<16x2xf32>
    %196 = arith.subf %150, %195 : vector<16x2xf32>
    %c3_84 = arith.constant 3 : index
    %c0_85 = arith.constant 0 : index
    %c0_86 = arith.constant 0 : index
    %197 = vector.load %arg18[%c3_84, %c0_85, %c0_86] : memref<4x16x2xf32, #tpu.memory_space<vmem>>, vector<1x16x2xf32>
    %198 = vector.shape_cast %197 : vector<1x16x2xf32> to vector<16x2xf32>
    %199 = arith.mulf %196, %198 : vector<16x2xf32>
    %c3_87 = arith.constant 3 : index
    %c0_88 = arith.constant 0 : index
    %c0_89 = arith.constant 0 : index
    %200 = vector.load %arg16[%c3_87, %c0_88, %c0_89] : memref<4x16x2xf32, #tpu.memory_space<vmem>>, vector<1x16x2xf32>
    %201 = vector.shape_cast %200 : vector<1x16x2xf32> to vector<16x2xf32>
    %cst_90 = arith.constant -5.000000e-01 : f32
    %202 = vector.broadcast %cst_90 : f32 to vector<16x2xf32>
    %203 = arith.mulf %202, %199 : vector<16x2xf32>
    %204 = arith.mulf %203, %199 : vector<16x2xf32>
    %205 = math.exp %204 : vector<16x2xf32>
    %206 = arith.mulf %201, %205 : vector<16x2xf32>
    %207 = arith.addf %193, %206 : vector<16x2xf32>
    %cst_91 = arith.constant 9.99999997E-7 : f32
    %208 = vector.broadcast %cst_91 : f32 to vector<16x2xf32>
    %209 = arith.addf %207, %208 : vector<16x2xf32>
    %210 = math.log %209 : vector<16x2xf32>
    %cst_92 = arith.constant 0.000000e+00 : f32
    %211 = vector.broadcast %cst_92 : f32 to vector<16x2xf32>
    %212 = arith.subf %211, %210 : vector<16x2xf32>
    %213 = vector.broadcast %4 : vector<16x1xf32> to vector<16x2xf32>
    %214 = arith.mulf %212, %213 : vector<16x2xf32>
    %215 = vector.shape_cast %214 : vector<16x2xf32> to vector<1x16x2xf32>
    %cst_93 = arith.constant dense<0.000000e+00> : vector<1xf32>
    %216 = vector.multi_reduction <add>, %215, %cst_93 [1, 2] : vector<1x16x2xf32> to vector<1xf32>
    %217 = vector.shape_cast %216 : vector<1xf32> to vector<1x1x1xf32>
    %218 = vector.extract %217[0, 0, 0] : f32 from vector<1x1x1xf32>
    %219 = vector.broadcast %218 : f32 to vector<1x1xf32>
    %c0_94 = arith.constant 0 : index
    %c0_95 = arith.constant 0 : index
    %220 = vector.load %arg15[%c0_94, %c0_95] : memref<16x2xf32, #tpu.memory_space<vmem>>, vector<16x2xf32>
    %221 = arith.subf %150, %220 : vector<16x2xf32>
    %222 = arith.mulf %221, %221 : vector<16x2xf32>
    %c0_96 = arith.constant 0 : index
    %c0_97 = arith.constant 0 : index
    %223 = vector.load %arg20[%c0_96, %c0_97] : memref<16x1xf32, #tpu.memory_space<vmem>>, vector<16x1xf32>
    %224 = vector.broadcast %223 : vector<16x1xf32> to vector<16x2xf32>
    %225 = arith.mulf %222, %224 : vector<16x2xf32>
    %226 = arith.mulf %225, %225 : vector<16x2xf32>
    %c0_98 = arith.constant 0 : index
    %c0_99 = arith.constant 0 : index
    %227 = vector.load %arg21[%c0_98, %c0_99] : memref<16x1xf32, #tpu.memory_space<vmem>>, vector<16x1xf32>
    %228 = vector.broadcast %227 : vector<16x1xf32> to vector<16x2xf32>
    %229 = arith.addf %226, %228 : vector<16x2xf32>
    %230 = arith.divf %226, %229 : vector<16x2xf32>
    %c0_100 = arith.constant 0 : index
    %c0_101 = arith.constant 0 : index
    %231 = vector.load %arg19[%c0_100, %c0_101] : memref<16x2xf32, #tpu.memory_space<vmem>>, vector<16x2xf32>
    %232 = arith.mulf %230, %231 : vector<16x2xf32>
    %233 = vector.broadcast %4 : vector<16x1xf32> to vector<16x2xf32>
    %234 = arith.mulf %232, %233 : vector<16x2xf32>
    %235 = vector.shape_cast %234 : vector<16x2xf32> to vector<1x16x2xf32>
    %cst_102 = arith.constant dense<0.000000e+00> : vector<1xf32>
    %236 = vector.multi_reduction <add>, %235, %cst_102 [1, 2] : vector<1x16x2xf32> to vector<1xf32>
    %237 = vector.shape_cast %236 : vector<1xf32> to vector<1x1x1xf32>
    %238 = vector.extract %237[0, 0, 0] : f32 from vector<1x1x1xf32>
    %239 = vector.broadcast %238 : f32 to vector<1x1xf32>
    %c0_103 = arith.constant 0 : index
    %c0_104 = arith.constant 0 : index
    %240 = vector.load %arg22[%c0_103, %c0_104] : memref<1x32xf32, #tpu.memory_space<vmem>>, vector<1x32xf32>
    %c0_105 = arith.constant 0 : index
    %c0_106 = arith.constant 0 : index
    %241 = vector.load %arg23[%c0_105, %c0_106] : memref<16x32xf32, #tpu.memory_space<vmem>>, vector<16x32xf32>
    %242 = vector.broadcast %240 : vector<1x32xf32> to vector<16x32xf32>
    %243 = arith.subf %242, %241 : vector<16x32xf32>
    %cst_107 = arith.constant 0.000000e+00 : f32
    %244 = vector.broadcast %cst_107 : f32 to vector<16x32xf32>
    %c0_108 = arith.constant 0 : index
    %c0_109 = arith.constant 0 : index
    %c0_110 = arith.constant 0 : index
    %245 = vector.load %arg25[%c0_108, %c0_109, %c0_110] : memref<4x16x32xf32, #tpu.memory_space<vmem>>, vector<1x16x32xf32>
    %246 = vector.shape_cast %245 : vector<1x16x32xf32> to vector<16x32xf32>
    %247 = arith.subf %243, %246 : vector<16x32xf32>
    %c0_111 = arith.constant 0 : index
    %c0_112 = arith.constant 0 : index
    %c0_113 = arith.constant 0 : index
    %248 = vector.load %arg26[%c0_111, %c0_112, %c0_113] : memref<4x16x32xf32, #tpu.memory_space<vmem>>, vector<1x16x32xf32>
    %249 = vector.shape_cast %248 : vector<1x16x32xf32> to vector<16x32xf32>
    %250 = arith.mulf %247, %249 : vector<16x32xf32>
    %c0_114 = arith.constant 0 : index
    %c0_115 = arith.constant 0 : index
    %c0_116 = arith.constant 0 : index
    %251 = vector.load %arg24[%c0_114, %c0_115, %c0_116] : memref<4x16x32xf32, #tpu.memory_space<vmem>>, vector<1x16x32xf32>
    %252 = vector.shape_cast %251 : vector<1x16x32xf32> to vector<16x32xf32>
    %cst_117 = arith.constant -5.000000e-01 : f32
    %253 = vector.broadcast %cst_117 : f32 to vector<16x32xf32>
    %254 = arith.mulf %253, %250 : vector<16x32xf32>
    %255 = arith.mulf %254, %250 : vector<16x32xf32>
    %256 = math.exp %255 : vector<16x32xf32>
    %257 = arith.mulf %252, %256 : vector<16x32xf32>
    %258 = arith.addf %244, %257 : vector<16x32xf32>
    %c1_118 = arith.constant 1 : index
    %c0_119 = arith.constant 0 : index
    %c0_120 = arith.constant 0 : index
    %259 = vector.load %arg25[%c1_118, %c0_119, %c0_120] : memref<4x16x32xf32, #tpu.memory_space<vmem>>, vector<1x16x32xf32>
    %260 = vector.shape_cast %259 : vector<1x16x32xf32> to vector<16x32xf32>
    %261 = arith.subf %243, %260 : vector<16x32xf32>
    %c1_121 = arith.constant 1 : index
    %c0_122 = arith.constant 0 : index
    %c0_123 = arith.constant 0 : index
    %262 = vector.load %arg26[%c1_121, %c0_122, %c0_123] : memref<4x16x32xf32, #tpu.memory_space<vmem>>, vector<1x16x32xf32>
    %263 = vector.shape_cast %262 : vector<1x16x32xf32> to vector<16x32xf32>
    %264 = arith.mulf %261, %263 : vector<16x32xf32>
    %c1_124 = arith.constant 1 : index
    %c0_125 = arith.constant 0 : index
    %c0_126 = arith.constant 0 : index
    %265 = vector.load %arg24[%c1_124, %c0_125, %c0_126] : memref<4x16x32xf32, #tpu.memory_space<vmem>>, vector<1x16x32xf32>
    %266 = vector.shape_cast %265 : vector<1x16x32xf32> to vector<16x32xf32>
    %cst_127 = arith.constant -5.000000e-01 : f32
    %267 = vector.broadcast %cst_127 : f32 to vector<16x32xf32>
    %268 = arith.mulf %267, %264 : vector<16x32xf32>
    %269 = arith.mulf %268, %264 : vector<16x32xf32>
    %270 = math.exp %269 : vector<16x32xf32>
    %271 = arith.mulf %266, %270 : vector<16x32xf32>
    %272 = arith.addf %258, %271 : vector<16x32xf32>
    %c2_128 = arith.constant 2 : index
    %c0_129 = arith.constant 0 : index
    %c0_130 = arith.constant 0 : index
    %273 = vector.load %arg25[%c2_128, %c0_129, %c0_130] : memref<4x16x32xf32, #tpu.memory_space<vmem>>, vector<1x16x32xf32>
    %274 = vector.shape_cast %273 : vector<1x16x32xf32> to vector<16x32xf32>
    %275 = arith.subf %243, %274 : vector<16x32xf32>
    %c2_131 = arith.constant 2 : index
    %c0_132 = arith.constant 0 : index
    %c0_133 = arith.constant 0 : index
    %276 = vector.load %arg26[%c2_131, %c0_132, %c0_133] : memref<4x16x32xf32, #tpu.memory_space<vmem>>, vector<1x16x32xf32>
    %277 = vector.shape_cast %276 : vector<1x16x32xf32> to vector<16x32xf32>
    %278 = arith.mulf %275, %277 : vector<16x32xf32>
    %c2_134 = arith.constant 2 : index
    %c0_135 = arith.constant 0 : index
    %c0_136 = arith.constant 0 : index
    %279 = vector.load %arg24[%c2_134, %c0_135, %c0_136] : memref<4x16x32xf32, #tpu.memory_space<vmem>>, vector<1x16x32xf32>
    %280 = vector.shape_cast %279 : vector<1x16x32xf32> to vector<16x32xf32>
    %cst_137 = arith.constant -5.000000e-01 : f32
    %281 = vector.broadcast %cst_137 : f32 to vector<16x32xf32>
    %282 = arith.mulf %281, %278 : vector<16x32xf32>
    %283 = arith.mulf %282, %278 : vector<16x32xf32>
    %284 = math.exp %283 : vector<16x32xf32>
    %285 = arith.mulf %280, %284 : vector<16x32xf32>
    %286 = arith.addf %272, %285 : vector<16x32xf32>
    %c3_138 = arith.constant 3 : index
    %c0_139 = arith.constant 0 : index
    %c0_140 = arith.constant 0 : index
    %287 = vector.load %arg25[%c3_138, %c0_139, %c0_140] : memref<4x16x32xf32, #tpu.memory_space<vmem>>, vector<1x16x32xf32>
    %288 = vector.shape_cast %287 : vector<1x16x32xf32> to vector<16x32xf32>
    %289 = arith.subf %243, %288 : vector<16x32xf32>
    %c3_141 = arith.constant 3 : index
    %c0_142 = arith.constant 0 : index
    %c0_143 = arith.constant 0 : index
    %290 = vector.load %arg26[%c3_141, %c0_142, %c0_143] : memref<4x16x32xf32, #tpu.memory_space<vmem>>, vector<1x16x32xf32>
    %291 = vector.shape_cast %290 : vector<1x16x32xf32> to vector<16x32xf32>
    %292 = arith.mulf %289, %291 : vector<16x32xf32>
    %c3_144 = arith.constant 3 : index
    %c0_145 = arith.constant 0 : index
    %c0_146 = arith.constant 0 : index
    %293 = vector.load %arg24[%c3_144, %c0_145, %c0_146] : memref<4x16x32xf32, #tpu.memory_space<vmem>>, vector<1x16x32xf32>
    %294 = vector.shape_cast %293 : vector<1x16x32xf32> to vector<16x32xf32>
    %cst_147 = arith.constant -5.000000e-01 : f32
    %295 = vector.broadcast %cst_147 : f32 to vector<16x32xf32>
    %296 = arith.mulf %295, %292 : vector<16x32xf32>
    %297 = arith.mulf %296, %292 : vector<16x32xf32>
    %298 = math.exp %297 : vector<16x32xf32>
    %299 = arith.mulf %294, %298 : vector<16x32xf32>
    %300 = arith.addf %286, %299 : vector<16x32xf32>
    %301 = vector.broadcast %4 : vector<16x1xf32> to vector<16x32xf32>
    %302 = vector.broadcast %149 : vector<1x32xf32> to vector<16x32xf32>
    %303 = arith.mulf %301, %302 : vector<16x32xf32>
    %c0_148 = arith.constant 0 : index
    %c0_149 = arith.constant 0 : index
    %304 = vector.load %arg29[%c0_148, %c0_149] : memref<16x32xf32, #tpu.memory_space<vmem>>, vector<16x32xf32>
    %305 = arith.mulf %303, %304 : vector<16x32xf32>
    %cst_150 = arith.constant 9.99999997E-7 : f32
    %306 = vector.broadcast %cst_150 : f32 to vector<16x32xf32>
    %307 = arith.addf %300, %306 : vector<16x32xf32>
    %308 = math.log %307 : vector<16x32xf32>
    %cst_151 = arith.constant 0.000000e+00 : f32
    %309 = vector.broadcast %cst_151 : f32 to vector<16x32xf32>
    %310 = arith.subf %309, %308 : vector<16x32xf32>
    %311 = arith.mulf %310, %305 : vector<16x32xf32>
    %312 = vector.shape_cast %311 : vector<16x32xf32> to vector<1x16x32xf32>
    %cst_152 = arith.constant dense<0.000000e+00> : vector<1xf32>
    %313 = vector.multi_reduction <add>, %312, %cst_152 [1, 2] : vector<1x16x32xf32> to vector<1xf32>
    %314 = vector.shape_cast %313 : vector<1xf32> to vector<1x1x1xf32>
    %315 = vector.extract %314[0, 0, 0] : f32 from vector<1x1x1xf32>
    %316 = vector.broadcast %315 : f32 to vector<1x1xf32>
    %c0_153 = arith.constant 0 : index
    %c0_154 = arith.constant 0 : index
    %317 = vector.load %arg27[%c0_153, %c0_154] : memref<16x32xf32, #tpu.memory_space<vmem>>, vector<16x32xf32>
    %318 = arith.subf %243, %317 : vector<16x32xf32>
    %319 = arith.mulf %318, %318 : vector<16x32xf32>
    %c0_155 = arith.constant 0 : index
    %c0_156 = arith.constant 0 : index
    %320 = vector.load %arg28[%c0_155, %c0_156] : memref<16x32xf32, #tpu.memory_space<vmem>>, vector<16x32xf32>
    %321 = arith.mulf %319, %320 : vector<16x32xf32>
    %322 = arith.mulf %321, %305 : vector<16x32xf32>
    %323 = vector.shape_cast %322 : vector<16x32xf32> to vector<1x16x32xf32>
    %cst_157 = arith.constant dense<0.000000e+00> : vector<1xf32>
    %324 = vector.multi_reduction <add>, %323, %cst_157 [1, 2] : vector<1x16x32xf32> to vector<1xf32>
    %325 = vector.shape_cast %324 : vector<1xf32> to vector<1x1x1xf32>
    %326 = vector.extract %325[0, 0, 0] : f32 from vector<1x1x1xf32>
    %327 = vector.broadcast %326 : f32 to vector<1x1xf32>
    %328 = arith.mulf %11, %11 : vector<1x1xf32>
    %329 = arith.subf %328, %11 : vector<1x1xf32>
    %330 = arith.divf %239, %11 : vector<1x1xf32>
    %cst_158 = arith.constant 2.000000e+00 : f32
    %331 = vector.broadcast %cst_158 : f32 to vector<1x1xf32>
    %332 = arith.mulf %330, %331 : vector<1x1xf32>
    %333 = arith.divf %219, %11 : vector<1x1xf32>
    %cst_159 = arith.constant 0.00999999977 : f32
    %334 = vector.broadcast %cst_159 : f32 to vector<1x1xf32>
    %335 = arith.mulf %333, %334 : vector<1x1xf32>
    %336 = arith.addf %332, %335 : vector<1x1xf32>
    %337 = arith.divf %327, %329 : vector<1x1xf32>
    %cst_160 = arith.constant 5.000000e+01 : f32
    %338 = vector.broadcast %cst_160 : f32 to vector<1x1xf32>
    %339 = arith.mulf %337, %338 : vector<1x1xf32>
    %340 = arith.addf %336, %339 : vector<1x1xf32>
    %341 = arith.divf %316, %329 : vector<1x1xf32>
    %cst_161 = arith.constant 5.000000e-02 : f32
    %342 = vector.broadcast %cst_161 : f32 to vector<1x1xf32>
    %343 = arith.mulf %341, %342 : vector<1x1xf32>
    %344 = arith.addf %340, %343 : vector<1x1xf32>
    %cst_162 = arith.constant 1.000000e+00 : f32
    %345 = vector.broadcast %cst_162 : f32 to vector<1x1xf32>
    %346 = arith.cmpf ogt, %9, %345 : vector<1x1xf32>
    %cst_163 = arith.constant 0.000000e+00 : f32
    %347 = vector.broadcast %cst_163 : f32 to vector<1x1xf32>
    %348 = arith.select %346, %344, %347 : vector<1x1xi1>, vector<1x1xf32>
    %c0_164 = arith.constant 0 : index
    %c0_165 = arith.constant 0 : index
    %349 = vector.load %arg32[%c0_164, %c0_165] : memref<1x1xf32, #tpu.memory_space<vmem>>, vector<1x1xf32>
    tpu.vector_store %arg32[%c0_164, %c0_165], %348 {strides = array<i32>} : memref<1x1xf32, #tpu.memory_space<vmem>>, vector<1x1xf32>,
    return
  }
}

</mosaic_0001>

<llo_original>
// kernel: tpu_custom_call.1
$region0: #{tpu_custom_call.1}
  #allocation0 [shape = 'u32[]', space=smem, size = 0x4, offset = 0x4, fixed_abs, tag = 'smem constant byte address 0x4 - core index']
  #allocation1 [shape = 'u32[144,128]{1,0:T(1,128)}', space=vmem, size = 0x12000, scoped, tag = 'internal scratch']
  %s0 = inlined_call_operand.smem [shape: u32[33], index: -1, kind: input, shape index: {}]
  %s1 = sld [smem:[%s0]]
  %s2 = scalar_lea.smem %s0, 1
  %s3 = sld [smem:[%s2]]
  %s4 = scalar_lea.smem %s0, 2
  %s5 = sld [smem:[%s4]]
  %s6 = scalar_lea.smem %s0, 3
  %s7 = sld [smem:[%s6]]
  %s8 = scalar_lea.smem %s0, 4
  %s9 = sld [smem:[%s8]]
  %s10 = scalar_lea.smem %s0, 5
  %s11 = sld [smem:[%s10]]
  %s12 = scalar_lea.smem %s0, 6
  %s13 = sld [smem:[%s12]]
  %s14 = scalar_lea.smem %s0, 7
  %s15 = sld [smem:[%s14]]
  %s16 = scalar_lea.smem %s0, 8
  %s17 = sld [smem:[%s16]]
  %s18 = scalar_lea.smem %s0, 9
  %s19 = sld [smem:[%s18]]
  %s20 = scalar_lea.smem %s0, 10
  %s21 = sld [smem:[%s20]]
  %s22 = scalar_lea.smem %s0, 11
  %s23 = sld [smem:[%s22]]
  %s24 = scalar_lea.smem %s0, 12
  %s25 = sld [smem:[%s24]]
  %s26 = scalar_lea.smem %s0, 13
  %s27 = sld [smem:[%s26]]
  %s28 = scalar_lea.smem %s0, 14
  %s29 = sld [smem:[%s28]]
  %s30 = scalar_lea.smem %s0, 15
  %s31 = sld [smem:[%s30]]
  %s32 = scalar_lea.smem %s0, 16
  %s33 = sld [smem:[%s32]]
  %s34 = scalar_lea.smem %s0, 17
  %s35 = sld [smem:[%s34]]
  %s36 = scalar_lea.smem %s0, 18
  %s37 = sld [smem:[%s36]]
  %s38 = scalar_lea.smem %s0, 19
  %s39 = sld [smem:[%s38]]
  %s40 = scalar_lea.smem %s0, 20
  %s41 = sld [smem:[%s40]]
  %s42 = scalar_lea.smem %s0, 21
  %s43 = sld [smem:[%s42]]
  %s44 = scalar_lea.smem %s0, 22
  %s45 = sld [smem:[%s44]]
  %s46 = scalar_lea.smem %s0, 23
  %s47 = sld [smem:[%s46]]
  %s48 = scalar_lea.smem %s0, 24
  %s49 = sld [smem:[%s48]]
  %s50 = scalar_lea.smem %s0, 25
  %s51 = sld [smem:[%s50]]
  %s52 = scalar_lea.smem %s0, 26
  %s53 = sld [smem:[%s52]]
  %s54 = scalar_lea.smem %s0, 27
  %s55 = sld [smem:[%s54]]
  %s56 = scalar_lea.smem %s0, 28
  %s57 = sld [smem:[%s56]]
  %s58 = scalar_lea.smem %s0, 29
  %s59 = sld [smem:[%s58]]
  %s60 = scalar_lea.smem %s0, 30
  %s61 = sld [smem:[%s60]]
  %s62 = scalar_lea.smem %s0, 31
  %s63 = sld [smem:[%s62]]
  %s64 = scalar_lea.smem %s0, 32
  %s65 = sld [smem:[%s64]]
  %66 = xla_tuple %s61, %s63, %s65
  %s67 = sld [smem:[#allocation0]]
  $region146: #{tpu_custom_call.1} parent=0
    _
  %s69 = ssub.s32 1, %s67
  %s70 = scalar_select 0, %s69, %s67
  $region1: #{tpu_custom_call.1} parent=0
    #allocation2 [shape = 'u8[512]{0}', space=vmem, size = 0x400, scoped, tag = 'output window, operand 0, single buffered']
    #allocation3 [shape = 's32[1]{0}', space=sflag, size = 0x4, scoped, tag = 'scoped memory for tpu_custom_call.1']
    #allocation4 [shape = 'u8[512]{0}', space=vmem, size = 0x400, scoped, tag = 'output window, operand 1, single buffered']
    #allocation5 [shape = 's32[1]{0}', space=sflag, size = 0x4, scoped, tag = 'scoped memory for tpu_custom_call.1']
    #allocation6 [shape = 'u8[512]{0}', space=vmem, size = 0x400, scoped, tag = 'output window, operand 2, single buffered']
    %71 = vsyncpa [#allocation3], 0
    %72 = vsyncpa [#allocation5], 0
    // Predicated region
    $region2: #{tpu_custom_call.1} parent=1 // pred_check
      _
    $region3: #{tpu_custom_call.1} parent=1 // pred_check_branch
      %74 = sbr.rel (0) target = $region5
    $region4: #{tpu_custom_call.1} parent=1 // pred_region
      _
    $region5: #{tpu_custom_call.1} parent=1 // pred_fallthru
      _
    // Predicated region
    $region6: #{tpu_custom_call.1} parent=1 // pred_check
      _
    $region7: #{tpu_custom_call.1} parent=1 // pred_check_branch
      %76 = sbr.rel (0) target = $region9
    $region8: #{tpu_custom_call.1} parent=1 // pred_region
      _
    $region9: #{tpu_custom_call.1} parent=1 // pred_fallthru
      _
    // Predicated region
    $region10: #{tpu_custom_call.1} parent=1 // pred_check
      _
    $region11: #{tpu_custom_call.1} parent=1 // pred_check_branch
      %78 = sbr.rel (0) target = $region13
    $region12: #{tpu_custom_call.1} parent=1 // pred_region
      _
    $region13: #{tpu_custom_call.1} parent=1 // pred_fallthru
      _
    // Predicated region
    $region14: #{tpu_custom_call.1} parent=1 // pred_check
      _
    $region15: #{tpu_custom_call.1} parent=1 // pred_check_branch
      %80 = sbr.rel (0) target = $region17
    $region16: #{tpu_custom_call.1} parent=1 // pred_region
      _
    $region17: #{tpu_custom_call.1} parent=1 // pred_fallthru
      _
    // Predicated region
    $region18: #{tpu_custom_call.1} parent=1 // pred_check
      _
    $region19: #{tpu_custom_call.1} parent=1 // pred_check_branch
      %82 = sbr.rel (0) target = $region21
    $region20: #{tpu_custom_call.1} parent=1 // pred_region
      _
    $region21: #{tpu_custom_call.1} parent=1 // pred_fallthru
      _
    // Predicated region
    $region22: #{tpu_custom_call.1} parent=1 // pred_check
      _
    $region23: #{tpu_custom_call.1} parent=1 // pred_check_branch
      %84 = sbr.rel (0) target = $region25
    $region24: #{tpu_custom_call.1} parent=1 // pred_region
      _
    $region25: #{tpu_custom_call.1} parent=1 // pred_fallthru
      _
    // Predicated region
    $region26: #{tpu_custom_call.1} parent=1 // pred_check
      _
    $region27: #{tpu_custom_call.1} parent=1 // pred_check_branch
      %86 = sbr.rel (0) target = $region29
    $region28: #{tpu_custom_call.1} parent=1 // pred_region
      _
    $region29: #{tpu_custom_call.1} parent=1 // pred_fallthru
      _
    // Predicated region
    $region30: #{tpu_custom_call.1} parent=1 // pred_check
      _
    $region31: #{tpu_custom_call.1} parent=1 // pred_check_branch
      %88 = sbr.rel (0) target = $region33
    $region32: #{tpu_custom_call.1} parent=1 // pred_region
      _
    $region33: #{tpu_custom_call.1} parent=1 // pred_fallthru
      _
    // Predicated region
    $region34: #{tpu_custom_call.1} parent=1 // pred_check
      _
    $region35: #{tpu_custom_call.1} parent=1 // pred_check_branch
      %90 = sbr.rel (0) target = $region37
    $region36: #{tpu_custom_call.1} parent=1 // pred_region
      _
    $region37: #{tpu_custom_call.1} parent=1 // pred_fallthru
      _
    // Predicated region
    $region38: #{tpu_custom_call.1} parent=1 // pred_check
      _
    $region39: #{tpu_custom_call.1} parent=1 // pred_check_branch
      %92 = sbr.rel (0) target = $region41
    $region40: #{tpu_custom_call.1} parent=1 // pred_region
      _
    $region41: #{tpu_custom_call.1} parent=1 // pred_fallthru
      _
    // Predicated region
    $region42: #{tpu_custom_call.1} parent=1 // pred_check
      _
    $region43: #{tpu_custom_call.1} parent=1 // pred_check_branch
      %94 = sbr.rel (0) target = $region45
    $region44: #{tpu_custom_call.1} parent=1 // pred_region
      _
    $region45: #{tpu_custom_call.1} parent=1 // pred_fallthru
      _
    // Predicated region
    $region46: #{tpu_custom_call.1} parent=1 // pred_check
      _
    $region47: #{tpu_custom_call.1} parent=1 // pred_check_branch
      %96 = sbr.rel (0) target = $region49
    $region48: #{tpu_custom_call.1} parent=1 // pred_region
      _
    $region49: #{tpu_custom_call.1} parent=1 // pred_fallthru
      _
    // Predicated region
    $region50: #{tpu_custom_call.1} parent=1 // pred_check
      _
    $region51: #{tpu_custom_call.1} parent=1 // pred_check_branch
      %98 = sbr.rel (0) target = $region53
    $region52: #{tpu_custom_call.1} parent=1 // pred_region
      _
    $region53: #{tpu_custom_call.1} parent=1 // pred_fallthru
      _
    // Predicated region
    $region54: #{tpu_custom_call.1} parent=1 // pred_check
      _
    $region55: #{tpu_custom_call.1} parent=1 // pred_check_branch
      %100 = sbr.rel (0) target = $region57
    $region56: #{tpu_custom_call.1} parent=1 // pred_region
      _
    $region57: #{tpu_custom_call.1} parent=1 // pred_fallthru
      _
    // Predicated region
    $region58: #{tpu_custom_call.1} parent=1 // pred_check
      _
    $region59: #{tpu_custom_call.1} parent=1 // pred_check_branch
      %102 = sbr.rel (0) target = $region61
    $region60: #{tpu_custom_call.1} parent=1 // pred_region
      _
    $region61: #{tpu_custom_call.1} parent=1 // pred_fallthru
      _
    // Predicated region
    $region62: #{tpu_custom_call.1} parent=1 // pred_check
      _
    $region63: #{tpu_custom_call.1} parent=1 // pred_check_branch
      %104 = sbr.rel (0) target = $region65
    $region64: #{tpu_custom_call.1} parent=1 // pred_region
      _
    $region65: #{tpu_custom_call.1} parent=1 // pred_fallthru
      _
    // Predicated region
    $region66: #{tpu_custom_call.1} parent=1 // pred_check
      _
    $region67: #{tpu_custom_call.1} parent=1 // pred_check_branch
      %106 = sbr.rel (0) target = $region69
    $region68: #{tpu_custom_call.1} parent=1 // pred_region
      _
    $region69: #{tpu_custom_call.1} parent=1 // pred_fallthru
      _
    // Predicated region
    $region70: #{tpu_custom_call.1} parent=1 // pred_check
      _
    $region71: #{tpu_custom_call.1} parent=1 // pred_check_branch
      %108 = sbr.rel (0) target = $region73
    $region72: #{tpu_custom_call.1} parent=1 // pred_region
      _
    $region73: #{tpu_custom_call.1} parent=1 // pred_fallthru
      _
    // Predicated region
    $region74: #{tpu_custom_call.1} parent=1 // pred_check
      _
    $region75: #{tpu_custom_call.1} parent=1 // pred_check_branch
      %110 = sbr.rel (0) target = $region77
    $region76: #{tpu_custom_call.1} parent=1 // pred_region
      _
    $region77: #{tpu_custom_call.1} parent=1 // pred_fallthru
      _
    // Predicated region
    $region78: #{tpu_custom_call.1} parent=1 // pred_check
      _
    $region79: #{tpu_custom_call.1} parent=1 // pred_check_branch
      %112 = sbr.rel (0) target = $region81
    $region80: #{tpu_custom_call.1} parent=1 // pred_region
      _
    $region81: #{tpu_custom_call.1} parent=1 // pred_fallthru
      _
    // Predicated region
    $region82: #{tpu_custom_call.1} parent=1 // pred_check
      _
    $region83: #{tpu_custom_call.1} parent=1 // pred_check_branch
      %114 = sbr.rel (0) target = $region85
    $region84: #{tpu_custom_call.1} parent=1 // pred_region
      _
    $region85: #{tpu_custom_call.1} parent=1 // pred_fallthru
      _
    // Predicated region
    $region86: #{tpu_custom_call.1} parent=1 // pred_check
      _
    $region87: #{tpu_custom_call.1} parent=1 // pred_check_branch
      %116 = sbr.rel (0) target = $region89
    $region88: #{tpu_custom_call.1} parent=1 // pred_region
      _
    $region89: #{tpu_custom_call.1} parent=1 // pred_fallthru
      _
    // Predicated region
    $region90: #{tpu_custom_call.1} parent=1 // pred_check
      _
    $region91: #{tpu_custom_call.1} parent=1 // pred_check_branch
      %118 = sbr.rel (0) target = $region93
    $region92: #{tpu_custom_call.1} parent=1 // pred_region
      _
    $region93: #{tpu_custom_call.1} parent=1 // pred_fallthru
      _
    // Predicated region
    $region94: #{tpu_custom_call.1} parent=1 // pred_check
      _
    $region95: #{tpu_custom_call.1} parent=1 // pred_check_branch
      %120 = sbr.rel (0) target = $region97
    $region96: #{tpu_custom_call.1} parent=1 // pred_region
      _
    $region97: #{tpu_custom_call.1} parent=1 // pred_fallthru
      _
    // Predicated region
    $region98: #{tpu_custom_call.1} parent=1 // pred_check
      _
    $region99: #{tpu_custom_call.1} parent=1 // pred_check_branch
      %122 = sbr.rel (0) target = $region101
    $region100: #{tpu_custom_call.1} parent=1 // pred_region
      _
    $region101: #{tpu_custom_call.1} parent=1 // pred_fallthru
      _
    // Predicated region
    $region102: #{tpu_custom_call.1} parent=1 // pred_check
      _
    $region103: #{tpu_custom_call.1} parent=1 // pred_check_branch
      %124 = sbr.rel (0) target = $region105
    $region104: #{tpu_custom_call.1} parent=1 // pred_region
      _
    $region105: #{tpu_custom_call.1} parent=1 // pred_fallthru
      _
    // Predicated region
    $region106: #{tpu_custom_call.1} parent=1 // pred_check
      _
    $region107: #{tpu_custom_call.1} parent=1 // pred_check_branch
      %126 = sbr.rel (0) target = $region109
    $region108: #{tpu_custom_call.1} parent=1 // pred_region
      _
    $region109: #{tpu_custom_call.1} parent=1 // pred_fallthru
      _
    // Predicated region
    $region110: #{tpu_custom_call.1} parent=1 // pred_check
      _
    $region111: #{tpu_custom_call.1} parent=1 // pred_check_branch
      %128 = sbr.rel (0) target = $region113
    $region112: #{tpu_custom_call.1} parent=1 // pred_region
      _
    $region113: #{tpu_custom_call.1} parent=1 // pred_fallthru
      _
    // Predicated region
    $region114: #{tpu_custom_call.1} parent=1 // pred_check
      _
    $region115: #{tpu_custom_call.1} parent=1 // pred_check_branch
      %130 = sbr.rel (0) target = $region117
    $region116: #{tpu_custom_call.1} parent=1 // pred_region
      _
    $region117: #{tpu_custom_call.1} parent=1 // pred_fallthru
      _
    // Predicated region
    $region118: #{tpu_custom_call.1} parent=1 // pred_check
      _
    $region119: #{tpu_custom_call.1} parent=1 // pred_check_branch
      %132 = sbr.rel (0) target = $region121
    $region120: #{tpu_custom_call.1} parent=1 // pred_region
      _
    $region121: #{tpu_custom_call.1} parent=1 // pred_fallthru
      _
    %v133 = vld [vmem:[%s1] sm:$0xff]
    %v134 = vld [vmem:[%s1 + $0x8] sm:$0xff]
    %vm135 = vcmp.gt.f32.partialorder %v133, 0.5
    %vm136 = vcmp.gt.f32.partialorder %v134, 0.5
    %v137 = vsel %vm135, 1, 0
    %v138 = vsel %vm136, 1, 0
    %v139 = vcvt.s32.f32 %v137
    %v140 = vcvt.s32.f32 %v138
    %vm141 = vcmask 7168
    %v142 = vsel %vm141, %v139, 0.0
    %v143 = vsel %vm141, %v140, 0.0
    %v144 = vadd.f32 %v142, %v143
    %145 = vadd.xlane.f32.xlu0 %v144
    %v146 = vpop.xlane.xlu0 %145
    %v147 = vrot.slane %v146, 4
    %v148 = vadd.f32 %v146, %v147
    %v149 = vrot.slane %v148, 2
    %v150 = vadd.f32 %v148, %v149
    %v151 = vrot.slane %v150, 1
    %v152 = vadd.f32 %v150, %v151
    %s153 = vtos %v152
    %v154 = vstv %s153
    %v155 = vmax.f32 %v154, 2.0
    %v156 = vld [vmem:[%s3] sm:$0x1]
    %vm157 = vcmp.gt.f32.partialorder %v156, 0.5
    %v158 = vsel %vm157, 1, 0
    %v159 = vcvt.s32.f32 %v158
    %v160 = vld [vmem:[%s5] sm:$0xff]
    %v161 = vld [vmem:[%s5 + $0x8] sm:$0xff]
    %v162 = vld [vmem:[%s7] sm:$0xff]
    %v163 = vld [vmem:[%s7 + $0x8] sm:$0xff]
    %v164 = vsub.f32 %v160, %v162
    %v165 = vsub.f32 %v161, %v163
    %v166 = vmul.f32 %v164, %v164
    %v167 = vmul.f32 %v165, %v165
    %169 = vset.pattern.permute.xlu0 0
    %170 = vperm.xlu0 %169, %v139
    %v171 = vpop.permute.xlu0 %170
    %174 = vset.pattern.permute.xlu0 0
    %175 = vperm.xlu0 %174, %v140
    %v176 = vpop.permute.xlu0 %175
    %v178 = vmul.f32 %v166, %v171
    %v179 = vmul.f32 %v167, %v176
    %vm180 = vcmask 23552
    %v181 = vsel %vm180, %v178, 0.0
    %v182 = vsel %vm180, %v179, 0.0
    %v183 = vadd.f32 %v181, %v182
    %184 = vadd.xlane.f32.xlu0 %v183
    %v185 = vpop.xlane.xlu0 %184
    %v186 = vrot.slane %v185, 4
    %v187 = vadd.f32 %v185, %v186
    %v188 = vrot.slane %v187, 2
    %v189 = vadd.f32 %v187, %v188
    %v190 = vrot.slane %v189, 1
    %v191 = vadd.f32 %v189, %v190
    %s192 = vtos %v191
    %v193 = vstv %s192
    %v194 = vrcp.pop %v155
    %v195 = vmul.f32 %v193, %v194
    %v196 = vld [vmem:[%s13] sm:$0xff]
    %v197 = vld [vmem:[%s13 + $0x8] sm:$0xff]
    %v198 = vmul.f32 %v196, %v171
    %v199 = vmul.f32 %v197, %v176
    %v201 = vlaneseq
    %v202 = vshrl.u32 %v201, 7
    %v203 = vsub.s32 0, %v202
    %v204 = vrot.slane %v159, %v203
    %v206 = vmul.f32 %v198, %v204
    %v207 = vmul.f32 %v199, %v204
    %v208 = vld [vmem:[%s9] sm:$0x1]
    %v209 = vld [vmem:[%s11] sm:$0xff]
    %v210 = vld [vmem:[%s11 + $0x8] sm:$0xff]
    %v212 = vlaneseq
    %v213 = vshrl.u32 %v212, 7
    %v214 = vsub.s32 0, %v213
    %v215 = vrot.slane %v208, %v214
    %v217 = vsub.f32 %v215, %v209
    %v218 = vsub.f32 %v215, %v210
    %v219 = vmul.f32 %v217, %v206
    %v220 = vmul.f32 %v218, %v207
    %v221 = vmul.f32 %v219, %v219
    %v222 = vmul.f32 %v220, %v220
    %vm223 = vcmask 392192
    %v224 = vsel %vm223, %v221, 0.0
    %v225 = vsel %vm223, %v222, 0.0
    %v226 = vadd.f32 %v224, %v225
    %227 = vadd.xlane.f32.xlu0 %v226
    %v228 = vpop.xlane.xlu0 %227
    %v229 = vrot.slane %v228, 4
    %v230 = vadd.f32 %v228, %v229
    %v231 = vrot.slane %v230, 2
    %v232 = vadd.f32 %v230, %v231
    %v233 = vrot.slane %v232, 1
    %v234 = vadd.f32 %v232, %v233
    %s235 = vtos %v234
    %v236 = vstv %s235
    %v237 = vsel %vm223, %v206, 0.0
    %v238 = vsel %vm223, %v207, 0.0
    %v239 = vadd.f32 %v237, %v238
    %240 = vadd.xlane.f32.xlu0 %v239
    %v241 = vpop.xlane.xlu0 %240
    %v242 = vrot.slane %v241, 4
    %v243 = vadd.f32 %v241, %v242
    %v244 = vrot.slane %v243, 2
    %v245 = vadd.f32 %v243, %v244
    %v246 = vrot.slane %v245, 1
    %v247 = vadd.f32 %v245, %v246
    %s248 = vtos %v247
    %v249 = vstv %s248
    %v250 = vmul.f32 %v249, 0.33333334
    %v251 = vadd.f32 %v250, 1e-06
    %v252 = vrcp.pop %v251
    %v253 = vmul.f32 %v236, %v252
    %v254 = vmul.f32 %v253, 10.0
    %v255 = vadd.f32 %v195, %v254
    %vm256 = vcmp.gt.f32.partialorder %v154, 1.0
    %v257 = vsel %vm256, %v255, 0.0
    %vm258 = vcmask 0
    %259 = vst.msk [vmem:[#allocation2] sm:$0x1] %vm258, %v257
    %v260 = vld [vmem:[%s15] sm:$0x1]
    %vm261 = vcmp.gt.f32.partialorder %v260, 0.5
    %v262 = vsel %vm261, 1, 0
    %v263 = vcvt.s32.f32 %v262
    %v264 = vld [vmem:[%s17] sm:$0xff]
    %v265 = vld [vmem:[%s17 + $0x8] sm:$0xff]
    %v266 = vld [vmem:[%s19] sm:$0x3]
    %v267 = vmul.f32 %v264, %v264
    %v268 = vmul.f32 %v265, %v265
    %271 = vrot.lane.b32.xlu0 %v267, 127
    %v272 = vpop.permute.xlu0 %271
    %273 = vrot.lane.b32.xlu0 %v268, 127
    %v274 = vpop.permute.xlu0 %273
    %v277 = vadd.f32 %v267, %v272
    %v278 = vadd.f32 %v268, %v274
    %v279 = vrsqrt.pop %v277
    %v280 = vrsqrt.pop %v278
    %v281 = vmul.f32 %v266, %v266
    %v283 = vrot.slane %v281, 1
    %v285 = vadd.f32 %v281, %v283
    %v286 = vrsqrt.pop %v285
    %v287 = vmul.f32 %v264, %v279
    %v288 = vmul.f32 %v265, %v280
    %v289 = vmul.f32 %v266, %v286
    %291 = vset.pattern.permute.xlu0 0
    %292 = vperm.xlu0 %291, %v287
    %v293 = vpop.permute.xlu0 %292
    %296 = vset.pattern.permute.xlu0 0
    %297 = vperm.xlu0 %296, %v288
    %v298 = vpop.permute.xlu0 %297
    %v300 = vlaneseq
    %v301 = vshrl.u32 %v300, 7
    %v302 = vsub.s32 0, %v301
    %v303 = vrot.slane %v289, %v302
    %v304 = vmul.f32 %v293, %v303
    %v305 = vmul.f32 %v298, %v303
    %308 = vrot.lane.b32.xlu0 %v279, 1
    %v309 = vpop.permute.xlu0 %308
    %310 = vrot.lane.b32.xlu0 %v280, 1
    %v311 = vpop.permute.xlu0 %310
    %v314 = vmul.f32 %v264, %v309
    %v315 = vmul.f32 %v265, %v311
    %v317 = vrot.slane %v286, 7
    %v319 = vmul.f32 %v266, %v317
    %321 = vset.pattern.permute.xlu0 1
    %322 = vperm.xlu0 %321, %v314
    %v323 = vpop.permute.xlu0 %322
    %326 = vset.pattern.permute.xlu0 1
    %327 = vperm.xlu0 %326, %v315
    %v328 = vpop.permute.xlu0 %327
    %v330 = vlaneseq
    %v331 = vshrl.u32 %v330, 7
    %v332 = vsub.s32 1, %v331
    %v333 = vrot.slane %v319, %v332
    %v334 = vmul.f32 %v323, %v333
    %v335 = vmul.f32 %v328, %v333
    %v336 = vadd.f32 %v304, %v334
    %v337 = vadd.f32 %v305, %v335
    %v338 = vand.u32 2147483647, %v336
    %v339 = vand.u32 2147483647, %v337
    %v340 = vld [vmem:[%s25] sm:$0xff]
    %v341 = vld [vmem:[%s25 + $0x8] sm:$0xff]
    %v342 = vmul.f32 %v340, %v171
    %v343 = vmul.f32 %v341, %v176
    %v345 = vlaneseq
    %v346 = vshrl.u32 %v345, 7
    %v347 = vsub.s32 0, %v346
    %v348 = vrot.slane %v263, %v347
    %v350 = vmul.f32 %v342, %v348
    %v351 = vmul.f32 %v343, %v348
    %v352 = vld [vmem:[%s23] sm:$0xff]
    %v353 = vld [vmem:[%s23 + $0x8] sm:$0xff]
    %v354 = vsub.f32 %v338, %v352
    %v355 = vsub.f32 %v339, %v353
    %v356 = vand.u32 2147483647, %v354
    %v357 = vand.u32 2147483647, %v355
    %v358 = vmul.f32 %v356, %v350
    %v359 = vmul.f32 %v357, %v351
    %vm360 = vcmask 130048
    %v361 = vsel %vm360, %v358, 0.0
    %v362 = vsel %vm360, %v359, 0.0
    %v363 = vadd.f32 %v361, %v362
    %364 = vadd.xlane.f32.xlu0 %v363
    %v365 = vpop.xlane.xlu0 %364
    %v366 = vrot.slane %v365, 4
    %v367 = vadd.f32 %v365, %v366
    %v368 = vrot.slane %v367, 2
    %v369 = vadd.f32 %v367, %v368
    %v370 = vrot.slane %v369, 1
    %v371 = vadd.f32 %v369, %v370
    %s372 = vtos %v371
    %v373 = vstv %s372
    %v374 = vsel %vm360, %v350, 0.0
    %v375 = vsel %vm360, %v351, 0.0
    %v376 = vadd.f32 %v374, %v375
    %377 = vadd.xlane.f32.xlu0 %v376
    %v378 = vpop.xlane.xlu0 %377
    %v379 = vrot.slane %v378, 4
    %v380 = vadd.f32 %v378, %v379
    %v381 = vrot.slane %v380, 2
    %v382 = vadd.f32 %v380, %v381
    %v383 = vrot.slane %v382, 1
    %v384 = vadd.f32 %v382, %v383
    %s385 = vtos %v384
    %v386 = vstv %s385
    %v387 = vadd.f32 %v386, 1e-06
    %v388 = vrcp.pop %v387
    %v389 = vmul.f32 %v373, %v388
    %390 = vset.pattern.permute.xlu0 0
    %391 = vperm.xlu0 %390, %v279
    %v392 = vpop.permute.xlu0 %391
    %394 = vset.pattern.permute.xlu0 0
    %395 = vperm.xlu0 %394, %v280
    %v396 = vpop.permute.xlu0 %395
    %v398 = vmul.f32 %v264, %v392
    %v399 = vmul.f32 %v265, %v396
    %v400 = vld [vmem:[%s21] sm:$0xff]
    %v401 = vld [vmem:[%s21 + $0x8] sm:$0xff]
    %v402 = vsub.f32 %v398, %v400
    %v403 = vsub.f32 %v399, %v401
    %v404 = vmul.f32 %v402, %v402
    %v405 = vmul.f32 %v403, %v403
    %v406 = vmul.f32 %v404, %v171
    %v407 = vmul.f32 %v405, %v176
    %vm408 = vcmask 15360
    %v409 = vsel %vm408, %v406, 0.0
    %v410 = vsel %vm408, %v407, 0.0
    %v411 = vadd.f32 %v409, %v410
    %412 = vadd.xlane.f32.xlu0 %v411
    %v413 = vpop.xlane.xlu0 %412
    %v414 = vrot.slane %v413, 4
    %v415 = vadd.f32 %v413, %v414
    %v416 = vrot.slane %v415, 2
    %v417 = vadd.f32 %v415, %v416
    %v418 = vrot.slane %v417, 1
    %v419 = vadd.f32 %v417, %v418
    %s420 = vtos %v419
    %v421 = vstv %s420
    %v422 = vmul.f32 %v421, %v194
    %v423 = vmul.f32 %v389, 100.0
    %v424 = vadd.f32 %v422, %v423
    %v425 = vsel %vm256, %v424, 0.0
    %426 = vst.msk [vmem:[#allocation4] sm:$0x1] %vm258, %v425
    %v427 = vld [vmem:[%s27] sm:$0x1]
    %vm428 = vcmp.gt.f32.partialorder %v427, 0.5
    %v429 = vsel %vm428, 1, 0
    %v430 = vcvt.s32.f32 %v429
    %v431 = vld [vmem:[%s29] sm:$0xff]
    %v432 = vld [vmem:[%s29 + $0x8] sm:$0xff]
    %v433 = vld [vmem:[%s35] sm:$0xff]
    %v434 = vld [vmem:[%s35 + $0x8] sm:$0xff]
    %v435 = vsub.f32 %v431, %v433
    %v436 = vsub.f32 %v432, %v434
    %v437 = vld [vmem:[%s37] sm:$0xff]
    %v438 = vld [vmem:[%s37 + $0x8] sm:$0xff]
    %v439 = vmul.f32 %v435, %v437
    %v440 = vmul.f32 %v436, %v438
    %v441 = vld [vmem:[%s33] sm:$0xff]
    %v442 = vld [vmem:[%s33 + $0x8] sm:$0xff]
    %v443 = vmul.f32 %v439, -0.5
    %v444 = vmul.f32 %v440, -0.5
    %v445 = vmul.f32 %v443, %v439
    %v446 = vmul.f32 %v444, %v440
    %v447 = vmul.f32 %v445, 1.442695
    %v448 = vpow.pop %v447
    %v449 = vmul.f32 %v446, 1.442695
    %v450 = vpow.pop %v449
    %v451 = vmul.f32 %v441, %v448
    %v452 = vmul.f32 %v442, %v450
    %v453 = vadd.f32 %v451, 0.0
    %v454 = vadd.f32 %v452, 0.0
    %s455 = scalar_lea.vmem %s35, 16
    %v456 = vld [vmem:[%s455] sm:$0xff]
    %v457 = vld [vmem:[%s455 + $0x8] sm:$0xff]
    %v458 = vsub.f32 %v431, %v456
    %v459 = vsub.f32 %v432, %v457
    %s460 = scalar_lea.vmem %s37, 16
    %v461 = vld [vmem:[%s460] sm:$0xff]
    %v462 = vld [vmem:[%s460 + $0x8] sm:$0xff]
    %v463 = vmul.f32 %v458, %v461
    %v464 = vmul.f32 %v459, %v462
    %s465 = scalar_lea.vmem %s33, 16
    %v466 = vld [vmem:[%s465] sm:$0xff]
    %v467 = vld [vmem:[%s465 + $0x8] sm:$0xff]
    %v468 = vmul.f32 %v463, -0.5
    %v469 = vmul.f32 %v464, -0.5
    %v470 = vmul.f32 %v468, %v463
    %v471 = vmul.f32 %v469, %v464
    %v472 = vmul.f32 %v470, 1.442695
    %v473 = vpow.pop %v472
    %v474 = vmul.f32 %v471, 1.442695
    %v475 = vpow.pop %v474
    %v476 = vmul.f32 %v466, %v473
    %v477 = vmul.f32 %v467, %v475
    %v478 = vadd.f32 %v453, %v476
    %v479 = vadd.f32 %v454, %v477
    %s480 = scalar_lea.vmem %s35, 32
    %v481 = vld [vmem:[%s480] sm:$0xff]
    %v482 = vld [vmem:[%s480 + $0x8] sm:$0xff]
    %v483 = vsub.f32 %v431, %v481
    %v484 = vsub.f32 %v432, %v482
    %s485 = scalar_lea.vmem %s37, 32
    %v486 = vld [vmem:[%s485] sm:$0xff]
    %v487 = vld [vmem:[%s485 + $0x8] sm:$0xff]
    %v488 = vmul.f32 %v483, %v486
    %v489 = vmul.f32 %v484, %v487
    %s490 = scalar_lea.vmem %s33, 32
    %v491 = vld [vmem:[%s490] sm:$0xff]
    %v492 = vld [vmem:[%s490 + $0x8] sm:$0xff]
    %v493 = vmul.f32 %v488, -0.5
    %v494 = vmul.f32 %v489, -0.5
    %v495 = vmul.f32 %v493, %v488
    %v496 = vmul.f32 %v494, %v489
    %v497 = vmul.f32 %v495, 1.442695
    %v498 = vpow.pop %v497
    %v499 = vmul.f32 %v496, 1.442695
    %v500 = vpow.pop %v499
    %v501 = vmul.f32 %v491, %v498
    %v502 = vmul.f32 %v492, %v500
    %v503 = vadd.f32 %v478, %v501
    %v504 = vadd.f32 %v479, %v502
    %s505 = scalar_lea.vmem %s35, 48
    %v506 = vld [vmem:[%s505] sm:$0xff]
    %v507 = vld [vmem:[%s505 + $0x8] sm:$0xff]
    %v508 = vsub.f32 %v431, %v506
    %v509 = vsub.f32 %v432, %v507
    %s510 = scalar_lea.vmem %s37, 48
    %v511 = vld [vmem:[%s510] sm:$0xff]
    %v512 = vld [vmem:[%s510 + $0x8] sm:$0xff]
    %v513 = vmul.f32 %v508, %v511
    %v514 = vmul.f32 %v509, %v512
    %s515 = scalar_lea.vmem %s33, 48
    %v516 = vld [vmem:[%s515] sm:$0xff]
    %v517 = vld [vmem:[%s515 + $0x8] sm:$0xff]
    %v518 = vmul.f32 %v513, -0.5
    %v519 = vmul.f32 %v514, -0.5
    %v520 = vmul.f32 %v518, %v513
    %v521 = vmul.f32 %v519, %v514
    %v522 = vmul.f32 %v520, 1.442695
    %v523 = vpow.pop %v522
    %v524 = vmul.f32 %v521, 1.442695
    %v525 = vpow.pop %v524
    %v526 = vmul.f32 %v516, %v523
    %v527 = vmul.f32 %v517, %v525
    %v528 = vadd.f32 %v503, %v526
    %v529 = vadd.f32 %v504, %v527
    %v530 = vadd.f32 %v528, 1e-06
    %v531 = vadd.f32 %v529, 1e-06
    %v532 = vlog2.pop %v530
    %v533 = vmul.f32 %v532, 0.6931472
    %v534 = vlog2.pop %v531
    %v535 = vmul.f32 %v534, 0.6931472
    %v536 = vsub.f32 0.0, %v533
    %v537 = vsub.f32 0.0, %v535
    %v538 = vmul.f32 %v536, %v171
    %v539 = vmul.f32 %v537, %v176
    %v540 = vsel %vm408, %v538, 0.0
    %v541 = vsel %vm408, %v539, 0.0
    %v542 = vadd.f32 %v540, %v541
    %543 = vadd.xlane.f32.xlu0 %v542
    %v544 = vpop.xlane.xlu0 %543
    %v545 = vrot.slane %v544, 4
    %v546 = vadd.f32 %v544, %v545
    %v547 = vrot.slane %v546, 2
    %v548 = vadd.f32 %v546, %v547
    %v549 = vrot.slane %v548, 1
    %v550 = vadd.f32 %v548, %v549
    %s551 = vtos %v550
    %v552 = vstv %s551
    %v553 = vld [vmem:[%s31] sm:$0xff]
    %v554 = vld [vmem:[%s31 + $0x8] sm:$0xff]
    %v555 = vsub.f32 %v431, %v553
    %v556 = vsub.f32 %v432, %v554
    %v557 = vmul.f32 %v555, %v555
    %v558 = vmul.f32 %v556, %v556
    %v559 = vld [vmem:[%s41] sm:$0xff]
    %v560 = vld [vmem:[%s41 + $0x8] sm:$0xff]
    %562 = vset.pattern.permute.xlu0 0
    %563 = vperm.xlu0 %562, %v559
    %v564 = vpop.permute.xlu0 %563
    %567 = vset.pattern.permute.xlu0 0
    %568 = vperm.xlu0 %567, %v560
    %v569 = vpop.permute.xlu0 %568
    %v571 = vmul.f32 %v557, %v564
    %v572 = vmul.f32 %v558, %v569
    %v573 = vmul.f32 %v571, %v571
    %v574 = vmul.f32 %v572, %v572
    %v575 = vld [vmem:[%s43] sm:$0xff]
    %v576 = vld [vmem:[%s43 + $0x8] sm:$0xff]
    %578 = vset.pattern.permute.xlu0 0
    %579 = vperm.xlu0 %578, %v575
    %v580 = vpop.permute.xlu0 %579
    %583 = vset.pattern.permute.xlu0 0
    %584 = vperm.xlu0 %583, %v576
    %v585 = vpop.permute.xlu0 %584
    %v587 = vadd.f32 %v573, %v580
    %v588 = vadd.f32 %v574, %v585
    %v589 = vrcp.pop %v587
    %v590 = vmul.f32 %v573, %v589
    %v591 = vrcp.pop %v588
    %v592 = vmul.f32 %v574, %v591
    %v593 = vld [vmem:[%s39] sm:$0xff]
    %v594 = vld [vmem:[%s39 + $0x8] sm:$0xff]
    %v595 = vmul.f32 %v590, %v593
    %v596 = vmul.f32 %v592, %v594
    %v597 = vmul.f32 %v595, %v171
    %v598 = vmul.f32 %v596, %v176
    %v599 = vsel %vm408, %v597, 0.0
    %v600 = vsel %vm408, %v598, 0.0
    %v601 = vadd.f32 %v599, %v600
    %602 = vadd.xlane.f32.xlu0 %v601
    %v603 = vpop.xlane.xlu0 %602
    %v604 = vrot.slane %v603, 4
    %v605 = vadd.f32 %v603, %v604
    %v606 = vrot.slane %v605, 2
    %v607 = vadd.f32 %v605, %v606
    %v608 = vrot.slane %v607, 1
    %v609 = vadd.f32 %v607, %v608
    %s610 = vtos %v609
    %v611 = vstv %s610
    %v612 = vld [vmem:[%s45] sm:$0x1]
    %v613 = vld [vmem:[%s47] sm:$0xff]
    %v614 = vld [vmem:[%s47 + $0x8] sm:$0xff]
    %v616 = vlaneseq
    %v617 = vshrl.u32 %v616, 7
    %v618 = vsub.s32 0, %v617
    %v619 = vrot.slane %v612, %v618
    %v621 = vsub.f32 %v619, %v613
    %v622 = vsub.f32 %v619, %v614
    %v623 = vld [vmem:[%s51] sm:$0xff]
    %v624 = vld [vmem:[%s51 + $0x8] sm:$0xff]
    %v625 = vsub.f32 %v621, %v623
    %v626 = vsub.f32 %v622, %v624
    %v627 = vld [vmem:[%s53] sm:$0xff]
    %v628 = vld [vmem:[%s53 + $0x8] sm:$0xff]
    %v629 = vmul.f32 %v625, %v627
    %v630 = vmul.f32 %v626, %v628
    %v631 = vld [vmem:[%s49] sm:$0xff]
    %v632 = vld [vmem:[%s49 + $0x8] sm:$0xff]
    %v633 = vmul.f32 %v629, -0.5
    %v634 = vmul.f32 %v630, -0.5
    %v635 = vmul.f32 %v633, %v629
    %v636 = vmul.f32 %v634, %v630
    %v637 = vmul.f32 %v635, 1.442695
    %v638 = vpow.pop %v637
    %v639 = vmul.f32 %v636, 1.442695
    %v640 = vpow.pop %v639
    %v641 = vmul.f32 %v631, %v638
    %v642 = vmul.f32 %v632, %v640
    %v643 = vadd.f32 %v641, 0.0
    %v644 = vadd.f32 %v642, 0.0
    %s645 = scalar_lea.vmem %s51, 16
    %v646 = vld [vmem:[%s645] sm:$0xff]
    %v647 = vld [vmem:[%s645 + $0x8] sm:$0xff]
    %v648 = vsub.f32 %v621, %v646
    %v649 = vsub.f32 %v622, %v647
    %s650 = scalar_lea.vmem %s53, 16
    %v651 = vld [vmem:[%s650] sm:$0xff]
    %v652 = vld [vmem:[%s650 + $0x8] sm:$0xff]
    %v653 = vmul.f32 %v648, %v651
    %v654 = vmul.f32 %v649, %v652
    %s655 = scalar_lea.vmem %s49, 16
    %v656 = vld [vmem:[%s655] sm:$0xff]
    %v657 = vld [vmem:[%s655 + $0x8] sm:$0xff]
    %v658 = vmul.f32 %v653, -0.5
    %v659 = vmul.f32 %v654, -0.5
    %v660 = vmul.f32 %v658, %v653
    %v661 = vmul.f32 %v659, %v654
    %v662 = vmul.f32 %v660, 1.442695
    %v663 = vpow.pop %v662
    %v664 = vmul.f32 %v661, 1.442695
    %v665 = vpow.pop %v664
    %v666 = vmul.f32 %v656, %v663
    %v667 = vmul.f32 %v657, %v665
    %v668 = vadd.f32 %v643, %v666
    %v669 = vadd.f32 %v644, %v667
    %s670 = scalar_lea.vmem %s51, 32
    %v671 = vld [vmem:[%s670] sm:$0xff]
    %v672 = vld [vmem:[%s670 + $0x8] sm:$0xff]
    %v673 = vsub.f32 %v621, %v671
    %v674 = vsub.f32 %v622, %v672
    %s675 = scalar_lea.vmem %s53, 32
    %v676 = vld [vmem:[%s675] sm:$0xff]
    %v677 = vld [vmem:[%s675 + $0x8] sm:$0xff]
    %v678 = vmul.f32 %v673, %v676
    %v679 = vmul.f32 %v674, %v677
    %s680 = scalar_lea.vmem %s49, 32
    %v681 = vld [vmem:[%s680] sm:$0xff]
    %v682 = vld [vmem:[%s680 + $0x8] sm:$0xff]
    %v683 = vmul.f32 %v678, -0.5
    %v684 = vmul.f32 %v679, -0.5
    %v685 = vmul.f32 %v683, %v678
    %v686 = vmul.f32 %v684, %v679
    %v687 = vmul.f32 %v685, 1.442695
    %v688 = vpow.pop %v687
    %v689 = vmul.f32 %v686, 1.442695
    %v690 = vpow.pop %v689
    %v691 = vmul.f32 %v681, %v688
    %v692 = vmul.f32 %v682, %v690
    %v693 = vadd.f32 %v668, %v691
    %v694 = vadd.f32 %v669, %v692
    %s695 = scalar_lea.vmem %s51, 48
    %v696 = vld [vmem:[%s695] sm:$0xff]
    %v697 = vld [vmem:[%s695 + $0x8] sm:$0xff]
    %v698 = vsub.f32 %v621, %v696
    %v699 = vsub.f32 %v622, %v697
    %s700 = scalar_lea.vmem %s53, 48
    %v701 = vld [vmem:[%s700] sm:$0xff]
    %v702 = vld [vmem:[%s700 + $0x8] sm:$0xff]
    %v703 = vmul.f32 %v698, %v701
    %v704 = vmul.f32 %v699, %v702
    %s705 = scalar_lea.vmem %s49, 48
    %v706 = vld [vmem:[%s705] sm:$0xff]
    %v707 = vld [vmem:[%s705 + $0x8] sm:$0xff]
    %v708 = vmul.f32 %v703, -0.5
    %v709 = vmul.f32 %v704, -0.5
    %v710 = vmul.f32 %v708, %v703
    %v711 = vmul.f32 %v709, %v704
    %v712 = vmul.f32 %v710, 1.442695
    %v713 = vpow.pop %v712
    %v714 = vmul.f32 %v711, 1.442695
    %v715 = vpow.pop %v714
    %v716 = vmul.f32 %v706, %v713
    %v717 = vmul.f32 %v707, %v715
    %v718 = vadd.f32 %v693, %v716
    %v719 = vadd.f32 %v694, %v717
    %v721 = vlaneseq
    %v722 = vshrl.u32 %v721, 7
    %v723 = vsub.s32 0, %v722
    %v724 = vrot.slane %v430, %v723
    %v726 = vmul.f32 %v171, %v724
    %v727 = vmul.f32 %v176, %v724
    %v728 = vld [vmem:[%s59] sm:$0xff]
    %v729 = vld [vmem:[%s59 + $0x8] sm:$0xff]
    %v730 = vmul.f32 %v726, %v728
    %v731 = vmul.f32 %v727, %v729
    %v732 = vadd.f32 %v718, 1e-06
    %v733 = vadd.f32 %v719, 1e-06
    %v734 = vlog2.pop %v732
    %v735 = vmul.f32 %v734, 0.6931472
    %v736 = vlog2.pop %v733
    %v737 = vmul.f32 %v736, 0.6931472
    %v738 = vsub.f32 0.0, %v735
    %v739 = vsub.f32 0.0, %v737
    %v740 = vmul.f32 %v738, %v730
    %v741 = vmul.f32 %v739, %v731
    %vm742 = vcmask 261120
    %v743 = vsel %vm742, %v740, 0.0
    %v744 = vsel %vm742, %v741, 0.0
    %v745 = vadd.f32 %v743, %v744
    %746 = vadd.xlane.f32.xlu0 %v745
    %v747 = vpop.xlane.xlu0 %746
    %v748 = vrot.slane %v747, 4
    %v749 = vadd.f32 %v747, %v748
    %v750 = vrot.slane %v749, 2
    %v751 = vadd.f32 %v749, %v750
    %v752 = vrot.slane %v751, 1
    %v753 = vadd.f32 %v751, %v752
    %s754 = vtos %v753
    %v755 = vstv %s754
    %v756 = vld [vmem:[%s55] sm:$0xff]
    %v757 = vld [vmem:[%s55 + $0x8] sm:$0xff]
    %v758 = vsub.f32 %v621, %v756
    %v759 = vsub.f32 %v622, %v757
    %v760 = vmul.f32 %v758, %v758
    %v761 = vmul.f32 %v759, %v759
    %v762 = vld [vmem:[%s57] sm:$0xff]
    %v763 = vld [vmem:[%s57 + $0x8] sm:$0xff]
    %v764 = vmul.f32 %v760, %v762
    %v765 = vmul.f32 %v761, %v763
    %v766 = vmul.f32 %v764, %v730
    %v767 = vmul.f32 %v765, %v731
    %v768 = vsel %vm742, %v766, 0.0
    %v769 = vsel %vm742, %v767, 0.0
    %v770 = vadd.f32 %v768, %v769
    %771 = vadd.xlane.f32.xlu0 %v770
    %v772 = vpop.xlane.xlu0 %771
    %v773 = vrot.slane %v772, 4
    %v774 = vadd.f32 %v772, %v773
    %v775 = vrot.slane %v774, 2
    %v776 = vadd.f32 %v774, %v775
    %v777 = vrot.slane %v776, 1
    %v778 = vadd.f32 %v776, %v777
    %s779 = vtos %v778
    %v780 = vstv %s779
    %v781 = vmul.f32 %v155, %v155
    %v782 = vsub.f32 %v781, %v155
    %v783 = vmul.f32 %v611, %v194
    %v784 = vmul.f32 %v783, 2.0
    %v785 = vmul.f32 %v552, %v194
    %v786 = vmul.f32 %v785, 0.01
    %v787 = vadd.f32 %v784, %v786
    %v788 = vrcp.pop %v782
    %v789 = vmul.f32 %v780, %v788
    %v790 = vmul.f32 %v789, 50.0
    %v791 = vadd.f32 %v787, %v790
    %v792 = vmul.f32 %v755, %v788
    %v793 = vmul.f32 %v792, 0.05
    %v794 = vadd.f32 %v791, %v793
    %v795 = vsel %vm256, %v794, 0.0
    %796 = vst.msk [vmem:[#allocation6] sm:$0x1] %vm258, %v795
    // Predicated region
    $region122: #{tpu_custom_call.1} parent=1 // pred_check
      _
    $region123: #{tpu_custom_call.1} parent=1 // pred_check_branch
      %798 = sbr.rel (0) target = $region125
    $region124: #{tpu_custom_call.1} parent=1 // pred_region
      %s800 = ssub.s32 16, 16
      %801 = vsyncadd [#allocation3], %s800
      %s803 = sshll.u32 [#allocation2], 4
      %s804 = int_to_ptr.vmem [resolvable:$true] %s803
      %806 = dma.vmem_to_hbm [thread:$0]  %s804, 16, %s61, [#allocation3]
    $region125: #{tpu_custom_call.1} parent=1 // pred_fallthru
      _
    // Predicated region
    $region126: #{tpu_custom_call.1} parent=1 // pred_check
      _
    $region127: #{tpu_custom_call.1} parent=1 // pred_check_branch
      %808 = sbr.rel (0) target = $region129
    $region128: #{tpu_custom_call.1} parent=1 // pred_region
      %s810 = ssub.s32 16, 16
      %811 = vsyncadd [#allocation5], %s810
      %s813 = sshll.u32 [#allocation4], 4
      %s814 = int_to_ptr.vmem [resolvable:$true] %s813
      %816 = dma.vmem_to_hbm [thread:$0]  %s814, 16, %s63, [#allocation5]
    $region129: #{tpu_custom_call.1} parent=1 // pred_fallthru
      _
    // Predicated region
    $region130: #{tpu_custom_call.1} parent=1 // pred_check
      _
    $region131: #{tpu_custom_call.1} parent=1 // pred_check_branch
      %818 = sbr.rel (0) target = $region133
    $region132: #{tpu_custom_call.1} parent=1 // pred_region
      %s820 = ssub.s32 16, 16
      %821 = vsyncadd [#allocation5], %s820
      %s823 = sshll.u32 [#allocation6], 4
      %s824 = int_to_ptr.vmem [resolvable:$true] %s823
      %826 = dma.vmem_to_hbm [thread:$0]  %s824, 16, %s65, [#allocation5]
    $region133: #{tpu_custom_call.1} parent=1 // pred_fallthru
      _
    // Predicated region
    $region134: #{tpu_custom_call.1} parent=1 // pred_check
      _
    $region135: #{tpu_custom_call.1} parent=1 // pred_check_branch
      %828 = sbr.rel (0) target = $region137
    $region136: #{tpu_custom_call.1} parent=1 // pred_region
      %829 = dma.done [#allocation3], 16
    $region137: #{tpu_custom_call.1} parent=1 // pred_fallthru
      _
    // Predicated region
    $region138: #{tpu_custom_call.1} parent=1 // pred_check
      _
    $region139: #{tpu_custom_call.1} parent=1 // pred_check_branch
      %831 = sbr.rel (0) target = $region141
    $region140: #{tpu_custom_call.1} parent=1 // pred_region
      %832 = dma.done [#allocation5], 16
    $region141: #{tpu_custom_call.1} parent=1 // pred_fallthru
      _
    // Predicated region
    $region142: #{tpu_custom_call.1} parent=1 // pred_check
      _
    $region143: #{tpu_custom_call.1} parent=1 // pred_check_branch
      %834 = sbr.rel (0) target = $region145
    $region144: #{tpu_custom_call.1} parent=1 // pred_region
      %835 = dma.done [#allocation5], 16
    $region145: #{tpu_custom_call.1} parent=1 // pred_fallthru
      _
    %836 = vsyncpa [#allocation3], 1
    %837 = vsyncpa [#allocation5], 1

</llo_original>
